<compile_context>
chip_gen: v6e
topology: v6e:2x2x1
jax: 0.10.0
libtpu: 0.0.40
codegen_flags: <defaults>
</compile_context>

<pallas_src>
import functools

import jax
import jax.numpy as jnp
from jax.experimental import pallas as pl
from jax.experimental.pallas import tpu as pltpu


def _fp_kernel(xyz1_ref, xyz2t_ref, sq2_ref, p1_ref, p2_ref,
               w1a_ref, w1b_ref, b1_ref, w2_ref, b2_ref,
               out_ref, *, mxu_bf16):
    x1 = xyz1_ref[0].astype(jnp.float32)     # (3, TN)
    x2t = xyz2t_ref[0].astype(jnp.float32)   # (S, 3)   (pre-transposed)
    sq2 = sq2_ref[0].astype(jnp.float32)     # (S, 1)   (precomputed |xyz2|^2)
    p1 = p1_ref[0]                           # (D1, TN)
    p2 = p2_ref[0]                           # (D2, S)

    mm_dtype = jnp.bfloat16 if mxu_bf16 else jnp.float32

    def mm(a, b):
        return jnp.dot(a.astype(mm_dtype), b.astype(mm_dtype),
                       preferred_element_type=jnp.float32)

    # Squared pairwise distance, (S, TN): -2*x2^T x1 + |x2|^2 + |x1|^2.
    # Kept in f32 (cancellation-sensitive) regardless of mxu_bf16.
    d = -2.0 * jnp.dot(x2t, x1, preferred_element_type=jnp.float32)
    d = d + sq2                                        # (S, 1) broadcast
    d = d + jnp.sum(x1 * x1, axis=0, keepdims=True)    # (1, TN) broadcast

    # 3 nearest neighbours: a single (S,TN)->(1,TN) reduction per neighbour,
    # accumulated straight into an unnormalised weight matrix + normaliser.
    # TODO(synk): assumes S >= 3, like the non-degenerate PyTorch branch.
    dcur = d
    wmat = jnp.zeros_like(d)
    norm = jnp.zeros((1, d.shape[1]), jnp.float32)
    for _ in range(3):
        mn = jnp.min(dcur, axis=0, keepdims=True)      # (1, TN)
        hit = dcur == mn                               # (S, TN)
        recip = 1.0 / (mn + 1e-8)                      # (1, TN)
        wmat = wmat + jnp.where(hit, recip, 0.0)
        norm = norm + recip
        dcur = jnp.where(hit, jnp.inf, dcur)

    # Gather of points2 expressed as a matmul; normalise after the matmul
    # (D2*TN multiplies + one reciprocal row instead of S*TN divides).
    interp = mm(p2, wmat)                              # (D2, TN)
    interp = interp * pl.reciprocal(norm, approx=False)

    # MLP layer 1: Conv1d(k=1) + folded eval-mode BN + ReLU.  The concat of
    # [points1, interp] is expressed as two matmuls on the split weight.
    h = mm(w1a_ref[...], p1) + mm(w1b_ref[...], interp) + b1_ref[...]
    h = jnp.maximum(h, 0.0)                            # (C1, TN)

    # MLP layer 2.
    o = mm(w2_ref[...], h) + b2_ref[...]
    o = jnp.maximum(o, 0.0)                            # (C2, TN)

    out_ref[0] = o.astype(out_ref.dtype)


def _pad_up(x, m):
    return ((x + m - 1) // m) * m


def _vmem_limit_bytes():
    """Generation-aware scoped-VMEM limit: ~3/4 of physical VMEM
    (-> ~96 MiB on 128 MiB v5e/v6e, ~48 MiB on 64 MiB v7x)."""
    try:
        cap = int(pltpu.get_tpu_info().vmem_capacity_bytes)
    except Exception:
        cap = 64 * 1024 * 1024          # conservative (v7x-sized) fallback
    return max(min(cap * 3 // 4, cap - 16 * 1024 * 1024), 32 * 1024 * 1024)


def _choose_tile_n(n_pad, S, d1, d2, c1, c2, batch, vmem_limit):
    """Largest multiple-of-128 divisor of the padded N whose per-tile working
    set fits the VMEM budget, preferring tiles that keep >= 4 grid steps so
    megacore / v7x's second TensorCore still gets work."""
    f32 = 4
    pad_s = _pad_up(S, 8)
    # Resident blocks (constant or b-only index, single-buffered): xyz2^T,
    # |xyz2|^2, points2, folded weights and biases.  Subtracted from the
    # budget; they do not scale with TILE_N.
    resident = f32 * (
        pad_s * 128                            # xyz2^T (S, 3) lane-padded
        + pad_s * 128                          # |xyz2|^2 (S, 1)
        + _pad_up(d2, 8) * _pad_up(S, 128)     # points2 (D2, S)
        + _pad_up(c1, 8) * _pad_up(d1, 128)    # w1a
        + _pad_up(c1, 8) * _pad_up(d2, 128)    # w1b
        + _pad_up(c1, 8) * 128                 # b1
        + _pad_up(c2, 8) * _pad_up(c1, 128)    # w2
        + _pad_up(c2, 8) * 128)                # b2
    # Per-N-column bytes: double-buffered pipeline slabs (xyz1, points1, out)
    # plus live compute intermediates (d / dcur / wmat + mask/where temps of
    # (S, .), interp (D2, .), h (C1, .), o (C2, .) and a few (1, .) rows).
    per_col = f32 * (
        2 * (_pad_up(3, 8) + _pad_up(d1, 8) + _pad_up(c2, 8))
        + 5 * pad_s
        + _pad_up(d2, 8) + _pad_up(c1, 8) + _pad_up(c2, 8)
        + 4 * 8)
    budget = max(vmem_limit - resident - 4 * 1024 * 1024, per_col * 128)
    n_blocks = n_pad // 128
    candidates = [128 * k for k in range(1, n_blocks + 1) if n_blocks % k == 0]
    fitting = [t for t in candidates if t * per_col <= budget] or [128]
    keeps_parallel = [t for t in fitting if batch * (n_pad // t) >= 4]
    return max(keeps_parallel) if keeps_parallel else max(fitting)


def pointnet_fp_forward(xyz1, xyz2, points1, points2, params, *, mxu_bf16=False):
    """xyz1:[B,3,N] xyz2:[B,3,S] points1:[B,D1,N] points2:[B,D2,S] -> [B,C2,N].

    mxu_bf16: cast MXU operands (gather + MLP matmuls) to bf16 with f32
    accumulation (v6e/v7x throughput lever; relaxes parity to ~1e-2).
    """
    B, _, N = xyz1.shape
    S = xyz2.shape[2]
    D1 = points1.shape[1]
    D2 = points2.shape[1]

    if S == 1:
        # TODO(synk): degenerate S == 1 repeat branch not implemented.
        raise NotImplementedError("S == 1 branch not implemented")

    # Fold BatchNorm (eval mode) into the 1x1 conv weights.
    def fold(w, b, gamma, beta, mean, var, eps=1e-5):
        scale = gamma / jnp.sqrt(var + eps)
        return w * scale[:, None], b * scale + beta - mean * scale

    w1f, b1f = fold(params["w1"], params["b1"], params["g1"], params["beta1"],
                    params["m1"], params["v1"])
    w2f, b2f = fold(params["w2"], params["b2"], params["g2"], params["beta2"],
                    params["m2"], params["v2"])
    C1, C2 = w1f.shape[0], w2f.shape[0]
    # Channels-first MLP: weights stay (C_out, C_in) -> no in-kernel transposes.
    w1a, w1b = w1f[:, :D1], w1f[:, D1:]          # columns for points1 / interp
    b1_col = b1f[:, None]                        # (C1, 1)
    b2_col = b2f[:, None]                        # (C2, 1)

    # Hoist per-b invariants out of the per-N-tile loop.
    xyz2t = jnp.transpose(xyz2, (0, 2, 1)).astype(jnp.float32)        # (B,S,3)
    sq2 = jnp.sum(xyz2.astype(jnp.float32) ** 2, axis=1)[:, :, None]  # (B,S,1)

    # Pad N up to a multiple of 128 so the N axis is always tiled and output
    # stores stay lane-dense; padded columns are sliced off at the end.
    n_pad = _pad_up(N, 128)
    if n_pad != N:
        padn = ((0, 0), (0, 0), (0, n_pad - N))
        xyz1 = jnp.pad(xyz1, padn)
        points1 = jnp.pad(points1, padn)

    vmem_limit = _vmem_limit_bytes()
    tn = _choose_tile_n(n_pad, S, D1, D2, C1, C2, B, vmem_limit)
    grid = (B, n_pad // tn)

    def build(single_buffer_resident):
        def resident_spec(shape, idx):
            # Blocks whose index is constant (weights/biases) or changes only
            # with b (xyz2^T, |xyz2|^2, points2): DMA'd at most once per b, so
            # a single VMEM buffer suffices instead of the default double one.
            if single_buffer_resident:
                return pl.BlockSpec(shape, idx, pipeline_mode=pl.Buffered(1))
            return pl.BlockSpec(shape, idx)

        return pl.pallas_call(
            functools.partial(_fp_kernel, mxu_bf16=mxu_bf16),
            out_shape=jax.ShapeDtypeStruct((B, C2, n_pad), jnp.float32),
            grid=grid,
            in_specs=[
                pl.BlockSpec((1, 3, tn), lambda b, n: (b, 0, n)),
                resident_spec((1, S, 3), lambda b, n: (b, 0, 0)),
                resident_spec((1, S, 1), lambda b, n: (b, 0, 0)),
                pl.BlockSpec((1, D1, tn), lambda b, n: (b, 0, n)),
                resident_spec((1, D2, S), lambda b, n: (b, 0, 0)),
                resident_spec((C1, D1), lambda b, n: (0, 0)),
                resident_spec((C1, D2), lambda b, n: (0, 0)),
                resident_spec((C1, 1), lambda b, n: (0, 0)),
                resident_spec((C2, C1), lambda b, n: (0, 0)),
                resident_spec((C2, 1), lambda b, n: (0, 0)),
            ],
            out_specs=pl.BlockSpec((1, C2, tn), lambda b, n: (b, 0, n)),
            compiler_params=pltpu.CompilerParams(
                dimension_semantics=("parallel", "parallel"),
                vmem_limit_bytes=vmem_limit),
        )

    args = (xyz1, xyz2t, sq2, points1, points2, w1a, w1b, b1_col, w2f, b2_col)
    try:
        out = build(True)(*args)
    except Exception:
        # Fallback for environments without per-BlockSpec pipeline_mode.
        out = build(False)(*args)

    return out[:, :, :N]                         # (B, C2, N)


def _reference(xyz1, xyz2, points1, points2, params):
    """Pure-JAX reference mirroring the PyTorch forward (eval-mode BN)."""
    x1 = jnp.transpose(xyz1, (0, 2, 1))
    x2 = jnp.transpose(xyz2, (0, 2, 1))
    p1 = jnp.transpose(points1, (0, 2, 1))
    p2 = jnp.transpose(points2, (0, 2, 1))
    d = (-2.0 * jnp.einsum("bnc,bsc->bns", x1, x2)
         + jnp.sum(x1 ** 2, -1)[..., None]
         + jnp.sum(x2 ** 2, -1)[:, None, :])
    idx = jnp.argsort(d, axis=-1)[:, :, :3]
    dsel = jnp.take_along_axis(d, idx, axis=-1)
    recip = 1.0 / (dsel + 1e-8)
    w = recip / jnp.sum(recip, -1, keepdims=True)
    gathered = jax.vmap(lambda pts, ix: pts[ix])(p2, idx)     # (B, N, 3, D2)
    interp = jnp.sum(gathered * w[..., None], axis=2)
    feat = jnp.concatenate([p1, interp], axis=-1)             # (B, N, D1+D2)

    def layer(x, wgt, b, g, beta, m, v):
        y = jnp.einsum("bnc,oc->bno", x, wgt) + b
        y = (y - m) / jnp.sqrt(v + 1e-5) * g + beta
        return jnp.maximum(y, 0.0)

    h = layer(feat, params["w1"], params["b1"], params["g1"], params["beta1"],
              params["m1"], params["v1"])
    o = layer(h, params["w2"], params["b2"], params["g2"], params["beta2"],
              params["m2"], params["v2"])
    return jnp.transpose(o, (0, 2, 1))


if __name__ == "__main__":
    B, N, S = 2, 16, 8
    D1, D2 = 6, 10
    in_channel = D1 + D2
    mlp = [32, 16]
    C1, C2 = mlp

    key = jax.random.PRNGKey(0)
    keys = jax.random.split(key, 12)
    xyz1 = jax.random.normal(keys[0], (B, 3, N), jnp.float32)
    xyz2 = jax.random.normal(keys[1], (B, 3, S), jnp.float32)
    points1 = jax.random.normal(keys[2], (B, D1, N), jnp.float32)
    points2 = jax.random.normal(keys[3], (B, D2, S), jnp.float32)

    params = {
        "w1": jax.random.normal(keys[4], (C1, in_channel), jnp.float32) * 0.1,
        "b1": jax.random.normal(keys[5], (C1,), jnp.float32) * 0.1,
        "g1": 1.0 + 0.1 * jax.random.normal(keys[6], (C1,), jnp.float32),
        "beta1": 0.1 * jax.random.normal(keys[7], (C1,), jnp.float32),
        "m1": jnp.zeros((C1,), jnp.float32),
        "v1": jnp.ones((C1,), jnp.float32),
        "w2": jax.random.normal(keys[8], (C2, C1), jnp.float32) * 0.1,
        "b2": jax.random.normal(keys[9], (C2,), jnp.float32) * 0.1,
        "g2": 1.0 + 0.1 * jax.random.normal(keys[10], (C2,), jnp.float32),
        "beta2": 0.1 * jax.random.normal(keys[11], (C2,), jnp.float32),
        "m2": jnp.zeros((C2,), jnp.float32),
        "v2": jnp.ones((C2,), jnp.float32),
    }

    out = pointnet_fp_forward(xyz1, xyz2, points1, points2, params)
    out = jax.block_until_ready(out)

    ref = _reference(xyz1, xyz2, points1, points2, params)
    assert out.shape == (B, C2, N), out.shape
    assert jnp.allclose(out, ref, atol=1e-4, rtol=1e-4), float(
        jnp.max(jnp.abs(out - ref)))

    print("KERNEL_OK")
</pallas_src>

<mosaic_0001>
module attributes {stable_mosaic.version = 11 : i64} {
  func.func @_fp_kernel(%arg0: i32, %arg1: i32, %arg2: memref<1x3x128xf32, #tpu.memory_space<vmem>>, %arg3: memref<1x8x3xf32, #tpu.memory_space<vmem>>, %arg4: memref<1x8x1xf32, #tpu.memory_space<vmem>>, %arg5: memref<1x6x128xf32, #tpu.memory_space<vmem>>, %arg6: memref<1x10x8xf32, #tpu.memory_space<vmem>>, %arg7: memref<32x6xf32, #tpu.memory_space<vmem>>, %arg8: memref<32x10xf32, #tpu.memory_space<vmem>>, %arg9: memref<32x1xf32, #tpu.memory_space<vmem>>, %arg10: memref<16x32xf32, #tpu.memory_space<vmem>>, %arg11: memref<16x1xf32, #tpu.memory_space<vmem>>, %arg12: memref<1x16x128xf32, #tpu.memory_space<vmem>>) attributes {dimension_semantics = [#tpu.dimension_semantics<parallel>, #tpu.dimension_semantics<parallel>], iteration_bounds = array<i64: 2, 1>, scalar_prefetch = 0 : i64, scratch_operands = 0 : i64, tpu.core_type = #tpu.core_type<tc>, window_params = [{transform_indices = @transform_0, window_bounds = array<i64: 1, 3, 128>}, {pipeline_mode = #tpu.pipeline_mode<synchronous>, transform_indices = @transform_1, window_bounds = array<i64: 1, 8, 3>}, {pipeline_mode = #tpu.pipeline_mode<synchronous>, transform_indices = @transform_2, window_bounds = array<i64: 1, 8, 1>}, {transform_indices = @transform_3, window_bounds = array<i64: 1, 6, 128>}, {pipeline_mode = #tpu.pipeline_mode<synchronous>, transform_indices = @transform_4, window_bounds = array<i64: 1, 10, 8>}, {pipeline_mode = #tpu.pipeline_mode<synchronous>, transform_indices = @transform_5, window_bounds = array<i64: 32, 6>}, {pipeline_mode = #tpu.pipeline_mode<synchronous>, transform_indices = @transform_6, window_bounds = array<i64: 32, 10>}, {pipeline_mode = #tpu.pipeline_mode<synchronous>, transform_indices = @transform_7, window_bounds = array<i64: 32, 1>}, {pipeline_mode = #tpu.pipeline_mode<synchronous>, transform_indices = @transform_8, window_bounds = array<i64: 16, 32>}, {pipeline_mode = #tpu.pipeline_mode<synchronous>, transform_indices = @transform_9, window_bounds = array<i64: 16, 1>}, {transform_indices = @transform_10, window_bounds = array<i64: 1, 16, 128>}]} {
    %c0 = arith.constant 0 : index
    %c0_0 = arith.constant 0 : index
    %c0_1 = arith.constant 0 : index
    %0 = vector.load %arg2[%c0, %c0_0, %c0_1] : memref<1x3x128xf32, #tpu.memory_space<vmem>>, vector<1x3x128xf32>
    %1 = vector.shape_cast %0 : vector<1x3x128xf32> to vector<3x128xf32>
    %c0_2 = arith.constant 0 : index
    %c0_3 = arith.constant 0 : index
    %c0_4 = arith.constant 0 : index
    %2 = vector.load %arg3[%c0_2, %c0_3, %c0_4] : memref<1x8x3xf32, #tpu.memory_space<vmem>>, vector<1x8x3xf32>
    %3 = vector.shape_cast %2 : vector<1x8x3xf32> to vector<8x3xf32>
    %c0_5 = arith.constant 0 : index
    %c0_6 = arith.constant 0 : index
    %c0_7 = arith.constant 0 : index
    %4 = vector.load %arg4[%c0_5, %c0_6, %c0_7] : memref<1x8x1xf32, #tpu.memory_space<vmem>>, vector<1x8x1xf32>
    %5 = vector.shape_cast %4 : vector<1x8x1xf32> to vector<8x1xf32>
    %c0_8 = arith.constant 0 : index
    %c0_9 = arith.constant 0 : index
    %c0_10 = arith.constant 0 : index
    %6 = vector.load %arg5[%c0_8, %c0_9, %c0_10] : memref<1x6x128xf32, #tpu.memory_space<vmem>>, vector<1x6x128xf32>
    %7 = vector.shape_cast %6 : vector<1x6x128xf32> to vector<6x128xf32>
    %c0_11 = arith.constant 0 : index
    %c0_12 = arith.constant 0 : index
    %c0_13 = arith.constant 0 : index
    %8 = vector.load %arg6[%c0_11, %c0_12, %c0_13] : memref<1x10x8xf32, #tpu.memory_space<vmem>>, vector<1x10x8xf32>
    %9 = vector.shape_cast %8 : vector<1x10x8xf32> to vector<10x8xf32>
    %cst = arith.constant dense<0.000000e+00> : vector<8x128xf32>
    %10 = tpu.matmul %3, %1, %cst {dimension_numbers = #tpu.dot_dimension_numbers<[1], [0], [0], [1], [0, 0, 1, 1], [], []>} : vector<8x3xf32>, vector<3x128xf32>, vector<8x128xf32> -> vector<8x128xf32>
    %cst_14 = arith.constant -2.000000e+00 : f32
    %11 = vector.broadcast %cst_14 : f32 to vector<8x128xf32>
    %12 = arith.mulf %11, %10 : vector<8x128xf32>
    %13 = vector.broadcast %5 : vector<8x1xf32> to vector<8x128xf32>
    %14 = arith.addf %12, %13 : vector<8x128xf32>
    %15 = arith.mulf %1, %1 : vector<3x128xf32>
    %cst_15 = arith.constant dense<0.000000e+00> : vector<128xf32>
    %16 = vector.multi_reduction <add>, %15, %cst_15 [0] : vector<3x128xf32> to vector<128xf32>
    %17 = vector.shape_cast %16 : vector<128xf32> to vector<1x128xf32>
    %18 = vector.broadcast %17 : vector<1x128xf32> to vector<8x128xf32>
    %19 = arith.addf %14, %18 : vector<8x128xf32>
    %cst_16 = arith.constant 0.000000e+00 : f32
    %20 = vector.broadcast %cst_16 : f32 to vector<8x128xf32>
    %cst_17 = arith.constant 0.000000e+00 : f32
    %21 = vector.broadcast %cst_17 : f32 to vector<1x128xf32>
    %cst_18 = arith.constant dense<0x7F800000> : vector<128xf32>
    %22 = vector.multi_reduction <minimumf>, %19, %cst_18 [0] : vector<8x128xf32> to vector<128xf32>
    %23 = vector.shape_cast %22 : vector<128xf32> to vector<1x128xf32>
    %24 = vector.broadcast %23 : vector<1x128xf32> to vector<8x128xf32>
    %25 = arith.cmpf oeq, %19, %24 : vector<8x128xf32>
    %cst_19 = arith.constant 9.99999993E-9 : f32
    %26 = vector.broadcast %cst_19 : f32 to vector<1x128xf32>
    %27 = arith.addf %23, %26 : vector<1x128xf32>
    %cst_20 = arith.constant 1.000000e+00 : f32
    %28 = vector.broadcast %cst_20 : f32 to vector<1x128xf32>
    %29 = arith.divf %28, %27 : vector<1x128xf32>
    %cst_21 = arith.constant 0.000000e+00 : f32
    %30 = vector.shape_cast %29 : vector<1x128xf32> to vector<1x128xf32>
    %31 = vector.broadcast %30 : vector<1x128xf32> to vector<8x128xf32>
    %32 = vector.broadcast %cst_21 : f32 to vector<8x128xf32>
    %33 = arith.select %25, %31, %32 : vector<8x128xi1>, vector<8x128xf32>
    %34 = arith.addf %20, %33 : vector<8x128xf32>
    %35 = arith.addf %21, %29 : vector<1x128xf32>
    %cst_22 = arith.constant 0x7F800000 : f32
    %36 = vector.broadcast %cst_22 : f32 to vector<8x128xf32>
    %37 = arith.select %25, %36, %19 : vector<8x128xi1>, vector<8x128xf32>
    %cst_23 = arith.constant dense<0x7F800000> : vector<128xf32>
    %38 = vector.multi_reduction <minimumf>, %37, %cst_23 [0] : vector<8x128xf32> to vector<128xf32>
    %39 = vector.shape_cast %38 : vector<128xf32> to vector<1x128xf32>
    %40 = vector.broadcast %39 : vector<1x128xf32> to vector<8x128xf32>
    %41 = arith.cmpf oeq, %37, %40 : vector<8x128xf32>
    %cst_24 = arith.constant 9.99999993E-9 : f32
    %42 = vector.broadcast %cst_24 : f32 to vector<1x128xf32>
    %43 = arith.addf %39, %42 : vector<1x128xf32>
    %cst_25 = arith.constant 1.000000e+00 : f32
    %44 = vector.broadcast %cst_25 : f32 to vector<1x128xf32>
    %45 = arith.divf %44, %43 : vector<1x128xf32>
    %cst_26 = arith.constant 0.000000e+00 : f32
    %46 = vector.shape_cast %45 : vector<1x128xf32> to vector<1x128xf32>
    %47 = vector.broadcast %46 : vector<1x128xf32> to vector<8x128xf32>
    %48 = vector.broadcast %cst_26 : f32 to vector<8x128xf32>
    %49 = arith.select %41, %47, %48 : vector<8x128xi1>, vector<8x128xf32>
    %50 = arith.addf %34, %49 : vector<8x128xf32>
    %51 = arith.addf %35, %45 : vector<1x128xf32>
    %cst_27 = arith.constant 0x7F800000 : f32
    %52 = vector.broadcast %cst_27 : f32 to vector<8x128xf32>
    %53 = arith.select %41, %52, %37 : vector<8x128xi1>, vector<8x128xf32>
    %cst_28 = arith.constant dense<0x7F800000> : vector<128xf32>
    %54 = vector.multi_reduction <minimumf>, %53, %cst_28 [0] : vector<8x128xf32> to vector<128xf32>
    %55 = vector.shape_cast %54 : vector<128xf32> to vector<1x128xf32>
    %56 = vector.broadcast %55 : vector<1x128xf32> to vector<8x128xf32>
    %57 = arith.cmpf oeq, %53, %56 : vector<8x128xf32>
    %cst_29 = arith.constant 9.99999993E-9 : f32
    %58 = vector.broadcast %cst_29 : f32 to vector<1x128xf32>
    %59 = arith.addf %55, %58 : vector<1x128xf32>
    %cst_30 = arith.constant 1.000000e+00 : f32
    %60 = vector.broadcast %cst_30 : f32 to vector<1x128xf32>
    %61 = arith.divf %60, %59 : vector<1x128xf32>
    %cst_31 = arith.constant 0.000000e+00 : f32
    %62 = vector.shape_cast %61 : vector<1x128xf32> to vector<1x128xf32>
    %63 = vector.broadcast %62 : vector<1x128xf32> to vector<8x128xf32>
    %64 = vector.broadcast %cst_31 : f32 to vector<8x128xf32>
    %65 = arith.select %57, %63, %64 : vector<8x128xi1>, vector<8x128xf32>
    %66 = arith.addf %50, %65 : vector<8x128xf32>
    %67 = arith.addf %51, %61 : vector<1x128xf32>
    %cst_32 = arith.constant dense<0.000000e+00> : vector<10x128xf32>
    %68 = tpu.matmul %9, %66, %cst_32 {dimension_numbers = #tpu.dot_dimension_numbers<[1], [0], [0], [1], [0, 0, 1, 1], [], []>} : vector<10x8xf32>, vector<8x128xf32>, vector<10x128xf32> -> vector<10x128xf32>
    %69 = tpu.reciprocal %67 : vector<1x128xf32> -> vector<1x128xf32>
    %70 = vector.broadcast %69 : vector<1x128xf32> to vector<10x128xf32>
    %71 = arith.mulf %68, %70 : vector<10x128xf32>
    %c0_33 = arith.constant 0 : index
    %c0_34 = arith.constant 0 : index
    %72 = vector.load %arg7[%c0_33, %c0_34] : memref<32x6xf32, #tpu.memory_space<vmem>>, vector<32x6xf32>
    %cst_35 = arith.constant dense<0.000000e+00> : vector<32x128xf32>
    %73 = tpu.matmul %72, %7, %cst_35 {dimension_numbers = #tpu.dot_dimension_numbers<[1], [0], [0], [1], [0, 0, 1, 1], [], []>} : vector<32x6xf32>, vector<6x128xf32>, vector<32x128xf32> -> vector<32x128xf32>
    %c0_36 = arith.constant 0 : index
    %c0_37 = arith.constant 0 : index
    %74 = vector.load %arg8[%c0_36, %c0_37] : memref<32x10xf32, #tpu.memory_space<vmem>>, vector<32x10xf32>
    %cst_38 = arith.constant dense<0.000000e+00> : vector<32x128xf32>
    %75 = tpu.matmul %74, %71, %cst_38 {dimension_numbers = #tpu.dot_dimension_numbers<[1], [0], [0], [1], [0, 0, 1, 1], [], []>} : vector<32x10xf32>, vector<10x128xf32>, vector<32x128xf32> -> vector<32x128xf32>
    %76 = arith.addf %73, %75 : vector<32x128xf32>
    %c0_39 = arith.constant 0 : index
    %c0_40 = arith.constant 0 : index
    %77 = vector.load %arg9[%c0_39, %c0_40] : memref<32x1xf32, #tpu.memory_space<vmem>>, vector<32x1xf32>
    %78 = vector.broadcast %77 : vector<32x1xf32> to vector<32x128xf32>
    %79 = arith.addf %76, %78 : vector<32x128xf32>
    %cst_41 = arith.constant 0.000000e+00 : f32
    %80 = vector.broadcast %cst_41 : f32 to vector<32x128xf32>
    %81 = arith.maximumf %79, %80 : vector<32x128xf32>
    %c0_42 = arith.constant 0 : index
    %c0_43 = arith.constant 0 : index
    %82 = vector.load %arg10[%c0_42, %c0_43] : memref<16x32xf32, #tpu.memory_space<vmem>>, vector<16x32xf32>
    %cst_44 = arith.constant dense<0.000000e+00> : vector<16x128xf32>
    %83 = tpu.matmul %82, %81, %cst_44 {dimension_numbers = #tpu.dot_dimension_numbers<[1], [0], [0], [1], [0, 0, 1, 1], [], []>} : vector<16x32xf32>, vector<32x128xf32>, vector<16x128xf32> -> vector<16x128xf32>
    %c0_45 = arith.constant 0 : index
    %c0_46 = arith.constant 0 : index
    %84 = vector.load %arg11[%c0_45, %c0_46] : memref<16x1xf32, #tpu.memory_space<vmem>>, vector<16x1xf32>
    %85 = vector.broadcast %84 : vector<16x1xf32> to vector<16x128xf32>
    %86 = arith.addf %83, %85 : vector<16x128xf32>
    %cst_47 = arith.constant 0.000000e+00 : f32
    %87 = vector.broadcast %cst_47 : f32 to vector<16x128xf32>
    %88 = arith.maximumf %86, %87 : vector<16x128xf32>
    %c0_48 = arith.constant 0 : index
    %c0_49 = arith.constant 0 : index
    %c0_50 = arith.constant 0 : index
    %89 = vector.load %arg12[%c0_48, %c0_49, %c0_50] : memref<1x16x128xf32, #tpu.memory_space<vmem>>, vector<1x16x128xf32>
    %90 = vector.shape_cast %89 : vector<1x16x128xf32> to vector<16x128xf32>
    %91 = vector.shape_cast %88 : vector<16x128xf32> to vector<1x16x128xf32>
    tpu.vector_store %arg12[%c0_48, %c0_49, %c0_50], %91 {strides = array<i32>} : memref<1x16x128xf32, #tpu.memory_space<vmem>>, vector<1x16x128xf32>,
    return
  }
  func.func @transform_0(%arg0: i32, %arg1: i32) -> (i32, i32, i32) {
    %c0_i32 = arith.constant 0 : i32
    %c0_i32_0 = arith.constant 0 : i32
    return %arg0, %c0_i32, %arg1 : i32, i32, i32
  }
  func.func @transform_1(%arg0: i32, %arg1: i32) -> (i32, i32, i32) {
    %c0_i32 = arith.constant 0 : i32
    %c0_i32_0 = arith.constant 0 : i32
    %c0_i32_1 = arith.constant 0 : i32
    return %arg0, %c0_i32, %c0_i32_0 : i32, i32, i32
  }
  func.func @transform_2(%arg0: i32, %arg1: i32) -> (i32, i32, i32) {
    %c0_i32 = arith.constant 0 : i32
    %c0_i32_0 = arith.constant 0 : i32
    %c0_i32_1 = arith.constant 0 : i32
    return %arg0, %c0_i32, %c0_i32_0 : i32, i32, i32
  }
  func.func @transform_3(%arg0: i32, %arg1: i32) -> (i32, i32, i32) {
    %c0_i32 = arith.constant 0 : i32
    %c0_i32_0 = arith.constant 0 : i32
    return %arg0, %c0_i32, %arg1 : i32, i32, i32
  }
  func.func @transform_4(%arg0: i32, %arg1: i32) -> (i32, i32, i32) {
    %c0_i32 = arith.constant 0 : i32
    %c0_i32_0 = arith.constant 0 : i32
    %c0_i32_1 = arith.constant 0 : i32
    return %arg0, %c0_i32, %c0_i32_0 : i32, i32, i32
  }
  func.func @transform_5(%arg0: i32, %arg1: i32) -> (i32, i32) {
    %c0_i32 = arith.constant 0 : i32
    %c0_i32_0 = arith.constant 0 : i32
    %c0_i32_1 = arith.constant 0 : i32
    return %c0_i32, %c0_i32_0 : i32, i32
  }
  func.func @transform_6(%arg0: i32, %arg1: i32) -> (i32, i32) {
    %c0_i32 = arith.constant 0 : i32
    %c0_i32_0 = arith.constant 0 : i32
    %c0_i32_1 = arith.constant 0 : i32
    return %c0_i32, %c0_i32_0 : i32, i32
  }
  func.func @transform_7(%arg0: i32, %arg1: i32) -> (i32, i32) {
    %c0_i32 = arith.constant 0 : i32
    %c0_i32_0 = arith.constant 0 : i32
    %c0_i32_1 = arith.constant 0 : i32
    return %c0_i32, %c0_i32_0 : i32, i32
  }
  func.func @transform_8(%arg0: i32, %arg1: i32) -> (i32, i32) {
    %c0_i32 = arith.constant 0 : i32
    %c0_i32_0 = arith.constant 0 : i32
    %c0_i32_1 = arith.constant 0 : i32
    return %c0_i32, %c0_i32_0 : i32, i32
  }
  func.func @transform_9(%arg0: i32, %arg1: i32) -> (i32, i32) {
    %c0_i32 = arith.constant 0 : i32
    %c0_i32_0 = arith.constant 0 : i32
    %c0_i32_1 = arith.constant 0 : i32
    return %c0_i32, %c0_i32_0 : i32, i32
  }
  func.func @transform_10(%arg0: i32, %arg1: i32) -> (i32, i32, i32) {
    %c0_i32 = arith.constant 0 : i32
    %c0_i32_0 = arith.constant 0 : i32
    return %arg0, %c0_i32, %arg1 : i32, i32, i32
  }
}

module attributes {stable_mosaic.version = 11 : i64} {
  func.func @_fp_kernel(%arg0: i32, %arg1: i32, %arg2: memref<1x3x128xf32, #tpu.memory_space<vmem>>, %arg3: memref<1x8x3xf32, #tpu.memory_space<vmem>>, %arg4: memref<1x8x1xf32, #tpu.memory_space<vmem>>, %arg5: memref<1x6x128xf32, #tpu.memory_space<vmem>>, %arg6: memref<1x10x8xf32, #tpu.memory_space<vmem>>, %arg7: memref<32x6xf32, #tpu.memory_space<vmem>>, %arg8: memref<32x10xf32, #tpu.memory_space<vmem>>, %arg9: memref<32x1xf32, #tpu.memory_space<vmem>>, %arg10: memref<16x32xf32, #tpu.memory_space<vmem>>, %arg11: memref<16x1xf32, #tpu.memory_space<vmem>>, %arg12: memref<1x16x128xf32, #tpu.memory_space<vmem>>) attributes {dimension_semantics = [#tpu.dimension_semantics<parallel>, #tpu.dimension_semantics<parallel>], iteration_bounds = array<i64: 2, 1>, scalar_prefetch = 0 : i64, scratch_operands = 0 : i64, tpu.core_type = #tpu.core_type<tc>, window_params = [{transform_indices = @transform_0, window_bounds = array<i64: 1, 3, 128>}, {transform_indices = @transform_1, window_bounds = array<i64: 1, 8, 3>}, {transform_indices = @transform_2, window_bounds = array<i64: 1, 8, 1>}, {transform_indices = @transform_3, window_bounds = array<i64: 1, 6, 128>}, {transform_indices = @transform_4, window_bounds = array<i64: 1, 10, 8>}, {pipeline_mode = #tpu.pipeline_mode<synchronous>, transform_indices = @transform_5, window_bounds = array<i64: 32, 6>}, {pipeline_mode = #tpu.pipeline_mode<synchronous>, transform_indices = @transform_6, window_bounds = array<i64: 32, 10>}, {pipeline_mode = #tpu.pipeline_mode<synchronous>, transform_indices = @transform_7, window_bounds = array<i64: 32, 1>}, {pipeline_mode = #tpu.pipeline_mode<synchronous>, transform_indices = @transform_8, window_bounds = array<i64: 16, 32>}, {pipeline_mode = #tpu.pipeline_mode<synchronous>, transform_indices = @transform_9, window_bounds = array<i64: 16, 1>}, {transform_indices = @transform_10, window_bounds = array<i64: 1, 16, 128>}]} {
    %c0 = arith.constant 0 : index
    %c0_0 = arith.constant 0 : index
    %c0_1 = arith.constant 0 : index
    %0 = vector.load %arg2[%c0, %c0_0, %c0_1] : memref<1x3x128xf32, #tpu.memory_space<vmem>>, vector<1x3x128xf32>
    %1 = vector.shape_cast %0 : vector<1x3x128xf32> to vector<3x128xf32>
    %c0_2 = arith.constant 0 : index
    %c0_3 = arith.constant 0 : index
    %c0_4 = arith.constant 0 : index
    %2 = vector.load %arg3[%c0_2, %c0_3, %c0_4] : memref<1x8x3xf32, #tpu.memory_space<vmem>>, vector<1x8x3xf32>
    %3 = vector.shape_cast %2 : vector<1x8x3xf32> to vector<8x3xf32>
    %c0_5 = arith.constant 0 : index
    %c0_6 = arith.constant 0 : index
    %c0_7 = arith.constant 0 : index
    %4 = vector.load %arg4[%c0_5, %c0_6, %c0_7] : memref<1x8x1xf32, #tpu.memory_space<vmem>>, vector<1x8x1xf32>
    %5 = vector.shape_cast %4 : vector<1x8x1xf32> to vector<8x1xf32>
    %c0_8 = arith.constant 0 : index
    %c0_9 = arith.constant 0 : index
    %c0_10 = arith.constant 0 : index
    %6 = vector.load %arg5[%c0_8, %c0_9, %c0_10] : memref<1x6x128xf32, #tpu.memory_space<vmem>>, vector<1x6x128xf32>
    %7 = vector.shape_cast %6 : vector<1x6x128xf32> to vector<6x128xf32>
    %c0_11 = arith.constant 0 : index
    %c0_12 = arith.constant 0 : index
    %c0_13 = arith.constant 0 : index
    %8 = vector.load %arg6[%c0_11, %c0_12, %c0_13] : memref<1x10x8xf32, #tpu.memory_space<vmem>>, vector<1x10x8xf32>
    %9 = vector.shape_cast %8 : vector<1x10x8xf32> to vector<10x8xf32>
    %cst = arith.constant dense<0.000000e+00> : vector<8x128xf32>
    %10 = tpu.matmul %3, %1, %cst {dimension_numbers = #tpu.dot_dimension_numbers<[1], [0], [0], [1], [0, 0, 1, 1], [], []>} : vector<8x3xf32>, vector<3x128xf32>, vector<8x128xf32> -> vector<8x128xf32>
    %cst_14 = arith.constant -2.000000e+00 : f32
    %11 = vector.broadcast %cst_14 : f32 to vector<8x128xf32>
    %12 = arith.mulf %11, %10 : vector<8x128xf32>
    %13 = vector.broadcast %5 : vector<8x1xf32> to vector<8x128xf32>
    %14 = arith.addf %12, %13 : vector<8x128xf32>
    %15 = arith.mulf %1, %1 : vector<3x128xf32>
    %cst_15 = arith.constant dense<0.000000e+00> : vector<128xf32>
    %16 = vector.multi_reduction <add>, %15, %cst_15 [0] : vector<3x128xf32> to vector<128xf32>
    %17 = vector.shape_cast %16 : vector<128xf32> to vector<1x128xf32>
    %18 = vector.broadcast %17 : vector<1x128xf32> to vector<8x128xf32>
    %19 = arith.addf %14, %18 : vector<8x128xf32>
    %cst_16 = arith.constant 0.000000e+00 : f32
    %20 = vector.broadcast %cst_16 : f32 to vector<8x128xf32>
    %cst_17 = arith.constant 0.000000e+00 : f32
    %21 = vector.broadcast %cst_17 : f32 to vector<1x128xf32>
    %cst_18 = arith.constant dense<0x7F800000> : vector<128xf32>
    %22 = vector.multi_reduction <minimumf>, %19, %cst_18 [0] : vector<8x128xf32> to vector<128xf32>
    %23 = vector.shape_cast %22 : vector<128xf32> to vector<1x128xf32>
    %24 = vector.broadcast %23 : vector<1x128xf32> to vector<8x128xf32>
    %25 = arith.cmpf oeq, %19, %24 : vector<8x128xf32>
    %cst_19 = arith.constant 9.99999993E-9 : f32
    %26 = vector.broadcast %cst_19 : f32 to vector<1x128xf32>
    %27 = arith.addf %23, %26 : vector<1x128xf32>
    %cst_20 = arith.constant 1.000000e+00 : f32
    %28 = vector.broadcast %cst_20 : f32 to vector<1x128xf32>
    %29 = arith.divf %28, %27 : vector<1x128xf32>
    %cst_21 = arith.constant 0.000000e+00 : f32
    %30 = vector.shape_cast %29 : vector<1x128xf32> to vector<1x128xf32>
    %31 = vector.broadcast %30 : vector<1x128xf32> to vector<8x128xf32>
    %32 = vector.broadcast %cst_21 : f32 to vector<8x128xf32>
    %33 = arith.select %25, %31, %32 : vector<8x128xi1>, vector<8x128xf32>
    %34 = arith.addf %20, %33 : vector<8x128xf32>
    %35 = arith.addf %21, %29 : vector<1x128xf32>
    %cst_22 = arith.constant 0x7F800000 : f32
    %36 = vector.broadcast %cst_22 : f32 to vector<8x128xf32>
    %37 = arith.select %25, %36, %19 : vector<8x128xi1>, vector<8x128xf32>
    %cst_23 = arith.constant dense<0x7F800000> : vector<128xf32>
    %38 = vector.multi_reduction <minimumf>, %37, %cst_23 [0] : vector<8x128xf32> to vector<128xf32>
    %39 = vector.shape_cast %38 : vector<128xf32> to vector<1x128xf32>
    %40 = vector.broadcast %39 : vector<1x128xf32> to vector<8x128xf32>
    %41 = arith.cmpf oeq, %37, %40 : vector<8x128xf32>
    %cst_24 = arith.constant 9.99999993E-9 : f32
    %42 = vector.broadcast %cst_24 : f32 to vector<1x128xf32>
    %43 = arith.addf %39, %42 : vector<1x128xf32>
    %cst_25 = arith.constant 1.000000e+00 : f32
    %44 = vector.broadcast %cst_25 : f32 to vector<1x128xf32>
    %45 = arith.divf %44, %43 : vector<1x128xf32>
    %cst_26 = arith.constant 0.000000e+00 : f32
    %46 = vector.shape_cast %45 : vector<1x128xf32> to vector<1x128xf32>
    %47 = vector.broadcast %46 : vector<1x128xf32> to vector<8x128xf32>
    %48 = vector.broadcast %cst_26 : f32 to vector<8x128xf32>
    %49 = arith.select %41, %47, %48 : vector<8x128xi1>, vector<8x128xf32>
    %50 = arith.addf %34, %49 : vector<8x128xf32>
    %51 = arith.addf %35, %45 : vector<1x128xf32>
    %cst_27 = arith.constant 0x7F800000 : f32
    %52 = vector.broadcast %cst_27 : f32 to vector<8x128xf32>
    %53 = arith.select %41, %52, %37 : vector<8x128xi1>, vector<8x128xf32>
    %cst_28 = arith.constant dense<0x7F800000> : vector<128xf32>
    %54 = vector.multi_reduction <minimumf>, %53, %cst_28 [0] : vector<8x128xf32> to vector<128xf32>
    %55 = vector.shape_cast %54 : vector<128xf32> to vector<1x128xf32>
    %56 = vector.broadcast %55 : vector<1x128xf32> to vector<8x128xf32>
    %57 = arith.cmpf oeq, %53, %56 : vector<8x128xf32>
    %cst_29 = arith.constant 9.99999993E-9 : f32
    %58 = vector.broadcast %cst_29 : f32 to vector<1x128xf32>
    %59 = arith.addf %55, %58 : vector<1x128xf32>
    %cst_30 = arith.constant 1.000000e+00 : f32
    %60 = vector.broadcast %cst_30 : f32 to vector<1x128xf32>
    %61 = arith.divf %60, %59 : vector<1x128xf32>
    %cst_31 = arith.constant 0.000000e+00 : f32
    %62 = vector.shape_cast %61 : vector<1x128xf32> to vector<1x128xf32>
    %63 = vector.broadcast %62 : vector<1x128xf32> to vector<8x128xf32>
    %64 = vector.broadcast %cst_31 : f32 to vector<8x128xf32>
    %65 = arith.select %57, %63, %64 : vector<8x128xi1>, vector<8x128xf32>
    %66 = arith.addf %50, %65 : vector<8x128xf32>
    %67 = arith.addf %51, %61 : vector<1x128xf32>
    %cst_32 = arith.constant dense<0.000000e+00> : vector<10x128xf32>
    %68 = tpu.matmul %9, %66, %cst_32 {dimension_numbers = #tpu.dot_dimension_numbers<[1], [0], [0], [1], [0, 0, 1, 1], [], []>} : vector<10x8xf32>, vector<8x128xf32>, vector<10x128xf32> -> vector<10x128xf32>
    %69 = tpu.reciprocal %67 : vector<1x128xf32> -> vector<1x128xf32>
    %70 = vector.broadcast %69 : vector<1x128xf32> to vector<10x128xf32>
    %71 = arith.mulf %68, %70 : vector<10x128xf32>
    %c0_33 = arith.constant 0 : index
    %c0_34 = arith.constant 0 : index
    %72 = vector.load %arg7[%c0_33, %c0_34] : memref<32x6xf32, #tpu.memory_space<vmem>>, vector<32x6xf32>
    %cst_35 = arith.constant dense<0.000000e+00> : vector<32x128xf32>
    %73 = tpu.matmul %72, %7, %cst_35 {dimension_numbers = #tpu.dot_dimension_numbers<[1], [0], [0], [1], [0, 0, 1, 1], [], []>} : vector<32x6xf32>, vector<6x128xf32>, vector<32x128xf32> -> vector<32x128xf32>
    %c0_36 = arith.constant 0 : index
    %c0_37 = arith.constant 0 : index
    %74 = vector.load %arg8[%c0_36, %c0_37] : memref<32x10xf32, #tpu.memory_space<vmem>>, vector<32x10xf32>
    %cst_38 = arith.constant dense<0.000000e+00> : vector<32x128xf32>
    %75 = tpu.matmul %74, %71, %cst_38 {dimension_numbers = #tpu.dot_dimension_numbers<[1], [0], [0], [1], [0, 0, 1, 1], [], []>} : vector<32x10xf32>, vector<10x128xf32>, vector<32x128xf32> -> vector<32x128xf32>
    %76 = arith.addf %73, %75 : vector<32x128xf32>
    %c0_39 = arith.constant 0 : index
    %c0_40 = arith.constant 0 : index
    %77 = vector.load %arg9[%c0_39, %c0_40] : memref<32x1xf32, #tpu.memory_space<vmem>>, vector<32x1xf32>
    %78 = vector.broadcast %77 : vector<32x1xf32> to vector<32x128xf32>
    %79 = arith.addf %76, %78 : vector<32x128xf32>
    %cst_41 = arith.constant 0.000000e+00 : f32
    %80 = vector.broadcast %cst_41 : f32 to vector<32x128xf32>
    %81 = arith.maximumf %79, %80 : vector<32x128xf32>
    %c0_42 = arith.constant 0 : index
    %c0_43 = arith.constant 0 : index
    %82 = vector.load %arg10[%c0_42, %c0_43] : memref<16x32xf32, #tpu.memory_space<vmem>>, vector<16x32xf32>
    %cst_44 = arith.constant dense<0.000000e+00> : vector<16x128xf32>
    %83 = tpu.matmul %82, %81, %cst_44 {dimension_numbers = #tpu.dot_dimension_numbers<[1], [0], [0], [1], [0, 0, 1, 1], [], []>} : vector<16x32xf32>, vector<32x128xf32>, vector<16x128xf32> -> vector<16x128xf32>
    %c0_45 = arith.constant 0 : index
    %c0_46 = arith.constant 0 : index
    %84 = vector.load %arg11[%c0_45, %c0_46] : memref<16x1xf32, #tpu.memory_space<vmem>>, vector<16x1xf32>
    %85 = vector.broadcast %84 : vector<16x1xf32> to vector<16x128xf32>
    %86 = arith.addf %83, %85 : vector<16x128xf32>
    %cst_47 = arith.constant 0.000000e+00 : f32
    %87 = vector.broadcast %cst_47 : f32 to vector<16x128xf32>
    %88 = arith.maximumf %86, %87 : vector<16x128xf32>
    %c0_48 = arith.constant 0 : index
    %c0_49 = arith.constant 0 : index
    %c0_50 = arith.constant 0 : index
    %89 = vector.load %arg12[%c0_48, %c0_49, %c0_50] : memref<1x16x128xf32, #tpu.memory_space<vmem>>, vector<1x16x128xf32>
    %90 = vector.shape_cast %89 : vector<1x16x128xf32> to vector<16x128xf32>
    %91 = vector.shape_cast %88 : vector<16x128xf32> to vector<1x16x128xf32>
    tpu.vector_store %arg12[%c0_48, %c0_49, %c0_50], %91 {strides = array<i32>} : memref<1x16x128xf32, #tpu.memory_space<vmem>>, vector<1x16x128xf32>,
    return
  }
  func.func @transform_0(%arg0: i32, %arg1: i32) -> (i32, i32, i32) {
    %c0_i32 = arith.constant 0 : i32
    %c0_i32_0 = arith.constant 0 : i32
    return %arg0, %c0_i32, %arg1 : i32, i32, i32
  }
  func.func @transform_1(%arg0: i32, %arg1: i32) -> (i32, i32, i32) {
    %c0_i32 = arith.constant 0 : i32
    %c0_i32_0 = arith.constant 0 : i32
    %c0_i32_1 = arith.constant 0 : i32
    return %arg0, %c0_i32, %c0_i32_0 : i32, i32, i32
  }
  func.func @transform_2(%arg0: i32, %arg1: i32) -> (i32, i32, i32) {
    %c0_i32 = arith.constant 0 : i32
    %c0_i32_0 = arith.constant 0 : i32
    %c0_i32_1 = arith.constant 0 : i32
    return %arg0, %c0_i32, %c0_i32_0 : i32, i32, i32
  }
  func.func @transform_3(%arg0: i32, %arg1: i32) -> (i32, i32, i32) {
    %c0_i32 = arith.constant 0 : i32
    %c0_i32_0 = arith.constant 0 : i32
    return %arg0, %c0_i32, %arg1 : i32, i32, i32
  }
  func.func @transform_4(%arg0: i32, %arg1: i32) -> (i32, i32, i32) {
    %c0_i32 = arith.constant 0 : i32
    %c0_i32_0 = arith.constant 0 : i32
    %c0_i32_1 = arith.constant 0 : i32
    return %arg0, %c0_i32, %c0_i32_0 : i32, i32, i32
  }
  func.func @transform_5(%arg0: i32, %arg1: i32) -> (i32, i32) {
    %c0_i32 = arith.constant 0 : i32
    %c0_i32_0 = arith.constant 0 : i32
    %c0_i32_1 = arith.constant 0 : i32
    return %c0_i32, %c0_i32_0 : i32, i32
  }
  func.func @transform_6(%arg0: i32, %arg1: i32) -> (i32, i32) {
    %c0_i32 = arith.constant 0 : i32
    %c0_i32_0 = arith.constant 0 : i32
    %c0_i32_1 = arith.constant 0 : i32
    return %c0_i32, %c0_i32_0 : i32, i32
  }
  func.func @transform_7(%arg0: i32, %arg1: i32) -> (i32, i32) {
    %c0_i32 = arith.constant 0 : i32
    %c0_i32_0 = arith.constant 0 : i32
    %c0_i32_1 = arith.constant 0 : i32
    return %c0_i32, %c0_i32_0 : i32, i32
  }
  func.func @transform_8(%arg0: i32, %arg1: i32) -> (i32, i32) {
    %c0_i32 = arith.constant 0 : i32
    %c0_i32_0 = arith.constant 0 : i32
    %c0_i32_1 = arith.constant 0 : i32
    return %c0_i32, %c0_i32_0 : i32, i32
  }
  func.func @transform_9(%arg0: i32, %arg1: i32) -> (i32, i32) {
    %c0_i32 = arith.constant 0 : i32
    %c0_i32_0 = arith.constant 0 : i32
    %c0_i32_1 = arith.constant 0 : i32
    return %c0_i32, %c0_i32_0 : i32, i32
  }
  func.func @transform_10(%arg0: i32, %arg1: i32) -> (i32, i32, i32) {
    %c0_i32 = arith.constant 0 : i32
    %c0_i32_0 = arith.constant 0 : i32
    return %arg0, %c0_i32, %arg1 : i32, i32, i32
  }
}

</mosaic_0001>

<llo_original>
// kernel: tpu_custom_call.1
$region0: #{tpu_custom_call.1}
  #allocation0 [shape = 'u32[]', space=smem, size = 0x4, offset = 0x4, fixed_abs, tag = 'smem constant byte address 0x4 - core index']
  #allocation1 [shape = 'u32[144,128]{1,0:T(1,128)}', space=vmem, size = 0x12000, scoped, tag = 'internal scratch']
  %s0 = inlined_call_operand.vmem [shape: f32[2,3,128], index: 0, kind: input, shape index: {}]
  %s1 = inlined_call_operand.vmem [shape: f32[2,8,3], index: 1, kind: input, shape index: {}]
  %s2 = inlined_call_operand.vmem [shape: f32[2,8,1], index: 2, kind: input, shape index: {}]
  %s3 = inlined_call_operand.vmem [shape: f32[2,6,128], index: 3, kind: input, shape index: {}]
  %s4 = inlined_call_operand.vmem [shape: f32[2,10,8], index: 4, kind: input, shape index: {}]
  %s5 = inlined_call_operand.vmem [shape: f32[32,6], index: 5, kind: input, shape index: {}]
  %s6 = inlined_call_operand.vmem [shape: f32[32,10], index: 6, kind: input, shape index: {}]
  %s7 = inlined_call_operand.vmem [shape: f32[32,1], index: 7, kind: input, shape index: {}]
  %s8 = inlined_call_operand.vmem [shape: f32[16,32], index: 8, kind: input, shape index: {}]
  %s9 = inlined_call_operand.vmem [shape: f32[16,1], index: 9, kind: input, shape index: {}]
  %s10 = inlined_call_operand.hbm [shape: f32[2,16,128], index: 10, kind: output, shape index: {}]
  %s11 = sld [smem:[#allocation0]]
  $region73: #{tpu_custom_call.1} parent=0
    _
  %s13 = ssub.s32 1, %s11
  %s14 = scalar_select 0, %s13, %s11
  $region1: #{tpu_custom_call.1} parent=0
    #allocation2 [shape = 'u8[16384]{0}', space=vmem, size = 0x4000, scoped, tag = 'output window, operand 0']
    #allocation3 [shape = 's32[2]{0}', space=sflag, size = 0x8, scoped, tag = 'scoped memory for tpu_custom_call.1']
    %15 = vsyncpa [#allocation3], 0
    %s16 = scalar_lea.sflag [#allocation3], 1
    %17 = vsyncpa %s16, 0
    loop: start=0, step=1, limit=4
    $region2: #{tpu_custom_call.1} parent=1 // loop_pre_header
      _
    $region3: #{tpu_custom_call.1} parent=1 // loop_header
      %s19 = sphi 0, %s23
      %p20 = scmp.ge.s32.totalorder %s19, 4
      %s26 = sphi 0, %s38
      %s27 = sphi 0, %s34
      %s28 = sphi 0, %s26
      %s29 = sphi 0, %s27
      %s30 = sphi 0, %s28
      %s31 = sphi 0, %s29
      %s43 = sphi 0, %s45
      %s46 = sphi 0, %s43
      %s47 = sphi 0, %s46
      %s63 = sphi 0, %s47
      %s69 = sphi 0, %s71
      %s72 = sphi 0, %s69
      %s73 = sphi 0, %s72
      %s89 = sphi 0, %s73
      %s95 = sphi 0, %s97
      %s98 = sphi 0, %s95
      %s99 = sphi 0, %s98
      %s115 = sphi 0, %s99
      %s123 = sphi 0, %s125
      %s126 = sphi 0, %s123
      %s127 = sphi 0, %s126
      %s143 = sphi 0, %s127
      %s149 = sphi 0, %s151
      %s152 = sphi 0, %s149
      %s153 = sphi 0, %s152
      %s169 = sphi 0, %s153
      %s173 = sphi 0, %s173
      %s175 = sphi 0, %s173
      %s176 = sphi 0, %s175
      %s190 = sphi 0, %s176
      %s194 = sphi 0, %s194
      %s196 = sphi 0, %s194
      %s197 = sphi 0, %s196
      %s211 = sphi 0, %s197
      %s215 = sphi 0, %s215
      %s217 = sphi 0, %s215
      %s218 = sphi 0, %s217
      %s232 = sphi 0, %s218
      %s236 = sphi 0, %s236
      %s238 = sphi 0, %s236
      %s239 = sphi 0, %s238
      %s253 = sphi 0, %s239
      %s257 = sphi 0, %s257
      %s259 = sphi 0, %s257
      %s260 = sphi 0, %s259
      %s274 = sphi 0, %s260
      %s282 = sphi 0, %s284
      %s285 = sphi 0, %s282
      %s286 = sphi 0, %s285
      %s302 = sphi 0, %s286
    $region4: #{tpu_custom_call.1} parent=1 // loop_header_branch
      %22 = sbr.rel (%p20) target = $region8
    $region5: #{tpu_custom_call.1} parent=1 // loop_body
      %s24 = ssub.s32 %s19, 1
      %s25 = ssub.s32 %s19, 2
      %s32 = sadd.s32 1, %s27
      %p33 = scmp.ge.s32.totalorder %s32, 1
      %s34 = scalar_select %p33, 0, %s32
      %s35 = sadd.s32 1, %s26
      %s36 = scalar_select %p33, %s35, %s26
      %p37 = scmp.ge.s32.totalorder %s36, 2
      %s38 = scalar_select %p37, 0, %s36
      %s39 = ssub.s32 %s26, %s38
      %s40 = ssub.s32 %s27, %s34
      %s41 = sor.u32 %s39, %s40
      %p42 = scmp.eq.s32.totalorder %s41, 0
      %s44 = sadd.s32 %s43, 1
      %s45 = scalar_select %p42, %s43, %s44
      %p48 = pneg %p42
      %p49 = scmp.eq.s32.totalorder %s19, 1
      %p50 = por %p48, %p49
      %p51 = scmp.ne.s32.totalorder %s43, %s46
      %p52 = scmp.eq.s32.totalorder %s19, 0
      %p53 = por %p51, %p52
      %p54 = scmp.ne.s32.totalorder %s43, %s46
      %p55 = scmp.eq.s32.totalorder %s24, 1
      %p56 = por %p54, %p55
      %p57 = scmp.ne.s32.totalorder %s46, %s47
      %p58 = scmp.eq.s32.totalorder %s24, 0
      %p59 = por %p57, %p58
      %p60 = scmp.ne.s32.totalorder %s46, %s47
      %p61 = scmp.eq.s32.totalorder %s25, 1
      %p62 = por %p60, %p61
      %p64 = scmp.ne.s32.totalorder %s47, %s63
      %p65 = scmp.eq.s32.totalorder %s25, 0
      %p66 = por %p64, %p65
      %s67 = ssub.s32 %s26, %s38
      %p68 = scmp.eq.s32.totalorder %s67, 0
      %s70 = sadd.s32 %s69, 1
      %s71 = scalar_select %p68, %s69, %s70
      %p74 = pneg %p68
      %p75 = scmp.eq.s32.totalorder %s19, 1
      %p76 = por %p74, %p75
      %p77 = scmp.ne.s32.totalorder %s69, %s72
      %p78 = scmp.eq.s32.totalorder %s19, 0
      %p79 = por %p77, %p78
      %p80 = scmp.ne.s32.totalorder %s69, %s72
      %p81 = scmp.eq.s32.totalorder %s24, 1
      %p82 = por %p80, %p81
      %p83 = scmp.ne.s32.totalorder %s72, %s73
      %p84 = scmp.eq.s32.totalorder %s24, 0
      %p85 = por %p83, %p84
      %p86 = scmp.ne.s32.totalorder %s72, %s73
      %p87 = scmp.eq.s32.totalorder %s25, 1
      %p88 = por %p86, %p87
      %p90 = scmp.ne.s32.totalorder %s73, %s89
      %p91 = scmp.eq.s32.totalorder %s25, 0
      %p92 = por %p90, %p91
      %s93 = ssub.s32 %s26, %s38
      %p94 = scmp.eq.s32.totalorder %s93, 0
      %s96 = sadd.s32 %s95, 1
      %s97 = scalar_select %p94, %s95, %s96
      %p100 = pneg %p94
      %p101 = scmp.eq.s32.totalorder %s19, 1
      %p102 = por %p100, %p101
      %p103 = scmp.ne.s32.totalorder %s95, %s98
      %p104 = scmp.eq.s32.totalorder %s19, 0
      %p105 = por %p103, %p104
      %p106 = scmp.ne.s32.totalorder %s95, %s98
      %p107 = scmp.eq.s32.totalorder %s24, 1
      %p108 = por %p106, %p107
      %p109 = scmp.ne.s32.totalorder %s98, %s99
      %p110 = scmp.eq.s32.totalorder %s24, 0
      %p111 = por %p109, %p110
      %p112 = scmp.ne.s32.totalorder %s98, %s99
      %p113 = scmp.eq.s32.totalorder %s25, 1
      %p114 = por %p112, %p113
      %p116 = scmp.ne.s32.totalorder %s99, %s115
      %p117 = scmp.eq.s32.totalorder %s25, 0
      %p118 = por %p116, %p117
      %s119 = ssub.s32 %s26, %s38
      %s120 = ssub.s32 %s27, %s34
      %s121 = sor.u32 %s119, %s120
      %p122 = scmp.eq.s32.totalorder %s121, 0
      %s124 = sadd.s32 %s123, 1
      %s125 = scalar_select %p122, %s123, %s124
      %p128 = pneg %p122
      %p129 = scmp.eq.s32.totalorder %s19, 1
      %p130 = por %p128, %p129
      %p131 = scmp.ne.s32.totalorder %s123, %s126
      %p132 = scmp.eq.s32.totalorder %s19, 0
      %p133 = por %p131, %p132
      %p134 = scmp.ne.s32.totalorder %s123, %s126
      %p135 = scmp.eq.s32.totalorder %s24, 1
      %p136 = por %p134, %p135
      %p137 = scmp.ne.s32.totalorder %s126, %s127
      %p138 = scmp.eq.s32.totalorder %s24, 0
      %p139 = por %p137, %p138
      %p140 = scmp.ne.s32.totalorder %s126, %s127
      %p141 = scmp.eq.s32.totalorder %s25, 1
      %p142 = por %p140, %p141
      %p144 = scmp.ne.s32.totalorder %s127, %s143
      %p145 = scmp.eq.s32.totalorder %s25, 0
      %p146 = por %p144, %p145
      %s147 = ssub.s32 %s26, %s38
      %p148 = scmp.eq.s32.totalorder %s147, 0
      %s150 = sadd.s32 %s149, 1
      %s151 = scalar_select %p148, %s149, %s150
      %p154 = pneg %p148
      %p155 = scmp.eq.s32.totalorder %s19, 1
      %p156 = por %p154, %p155
      %p157 = scmp.ne.s32.totalorder %s149, %s152
      %p158 = scmp.eq.s32.totalorder %s19, 0
      %p159 = por %p157, %p158
      %p160 = scmp.ne.s32.totalorder %s149, %s152
      %p161 = scmp.eq.s32.totalorder %s24, 1
      %p162 = por %p160, %p161
      %p163 = scmp.ne.s32.totalorder %s152, %s153
      %p164 = scmp.eq.s32.totalorder %s24, 0
      %p165 = por %p163, %p164
      %p166 = scmp.ne.s32.totalorder %s152, %s153
      %p167 = scmp.eq.s32.totalorder %s25, 1
      %p168 = por %p166, %p167
      %p170 = scmp.ne.s32.totalorder %s153, %s169
      %p171 = scmp.eq.s32.totalorder %s25, 0
      %p172 = por %p170, %p171
      %s174 = sadd.s32 %s173, 1
      %p177 = scmp.eq.s32.totalorder %s19, 1
      %p178 = scmp.ne.s32.totalorder %s173, %s175
      %p179 = scmp.eq.s32.totalorder %s19, 0
      %p180 = por %p178, %p179
      %p181 = scmp.ne.s32.totalorder %s173, %s175
      %p182 = scmp.eq.s32.totalorder %s24, 1
      %p183 = por %p181, %p182
      %p184 = scmp.ne.s32.totalorder %s175, %s176
      %p185 = scmp.eq.s32.totalorder %s24, 0
      %p186 = por %p184, %p185
      %p187 = scmp.ne.s32.totalorder %s175, %s176
      %p188 = scmp.eq.s32.totalorder %s25, 1
      %p189 = por %p187, %p188
      %p191 = scmp.ne.s32.totalorder %s176, %s190
      %p192 = scmp.eq.s32.totalorder %s25, 0
      %p193 = por %p191, %p192
      %s195 = sadd.s32 %s194, 1
      %p198 = scmp.eq.s32.totalorder %s19, 1
      %p199 = scmp.ne.s32.totalorder %s194, %s196
      %p200 = scmp.eq.s32.totalorder %s19, 0
      %p201 = por %p199, %p200
      %p202 = scmp.ne.s32.totalorder %s194, %s196
      %p203 = scmp.eq.s32.totalorder %s24, 1
      %p204 = por %p202, %p203
      %p205 = scmp.ne.s32.totalorder %s196, %s197
      %p206 = scmp.eq.s32.totalorder %s24, 0
      %p207 = por %p205, %p206
      %p208 = scmp.ne.s32.totalorder %s196, %s197
      %p209 = scmp.eq.s32.totalorder %s25, 1
      %p210 = por %p208, %p209
      %p212 = scmp.ne.s32.totalorder %s197, %s211
      %p213 = scmp.eq.s32.totalorder %s25, 0
      %p214 = por %p212, %p213
      %s216 = sadd.s32 %s215, 1
      %p219 = scmp.eq.s32.totalorder %s19, 1
      %p220 = scmp.ne.s32.totalorder %s215, %s217
      %p221 = scmp.eq.s32.totalorder %s19, 0
      %p222 = por %p220, %p221
      %p223 = scmp.ne.s32.totalorder %s215, %s217
      %p224 = scmp.eq.s32.totalorder %s24, 1
      %p225 = por %p223, %p224
      %p226 = scmp.ne.s32.totalorder %s217, %s218
      %p227 = scmp.eq.s32.totalorder %s24, 0
      %p228 = por %p226, %p227
      %p229 = scmp.ne.s32.totalorder %s217, %s218
      %p230 = scmp.eq.s32.totalorder %s25, 1
      %p231 = por %p229, %p230
      %p233 = scmp.ne.s32.totalorder %s218, %s232
      %p234 = scmp.eq.s32.totalorder %s25, 0
      %p235 = por %p233, %p234
      %s237 = sadd.s32 %s236, 1
      %p240 = scmp.eq.s32.totalorder %s19, 1
      %p241 = scmp.ne.s32.totalorder %s236, %s238
      %p242 = scmp.eq.s32.totalorder %s19, 0
      %p243 = por %p241, %p242
      %p244 = scmp.ne.s32.totalorder %s236, %s238
      %p245 = scmp.eq.s32.totalorder %s24, 1
      %p246 = por %p244, %p245
      %p247 = scmp.ne.s32.totalorder %s238, %s239
      %p248 = scmp.eq.s32.totalorder %s24, 0
      %p249 = por %p247, %p248
      %p250 = scmp.ne.s32.totalorder %s238, %s239
      %p251 = scmp.eq.s32.totalorder %s25, 1
      %p252 = por %p250, %p251
      %p254 = scmp.ne.s32.totalorder %s239, %s253
      %p255 = scmp.eq.s32.totalorder %s25, 0
      %p256 = por %p254, %p255
      %s258 = sadd.s32 %s257, 1
      %p261 = scmp.eq.s32.totalorder %s19, 1
      %p262 = scmp.ne.s32.totalorder %s257, %s259
      %p263 = scmp.eq.s32.totalorder %s19, 0
      %p264 = por %p262, %p263
      %p265 = scmp.ne.s32.totalorder %s257, %s259
      %p266 = scmp.eq.s32.totalorder %s24, 1
      %p267 = por %p265, %p266
      %p268 = scmp.ne.s32.totalorder %s259, %s260
      %p269 = scmp.eq.s32.totalorder %s24, 0
      %p270 = por %p268, %p269
      %p271 = scmp.ne.s32.totalorder %s259, %s260
      %p272 = scmp.eq.s32.totalorder %s25, 1
      %p273 = por %p271, %p272
      %p275 = scmp.ne.s32.totalorder %s260, %s274
      %p276 = scmp.eq.s32.totalorder %s25, 0
      %p277 = por %p275, %p276
      %s278 = ssub.s32 %s26, %s38
      %s279 = ssub.s32 %s27, %s34
      %s280 = sor.u32 %s278, %s279
      %p281 = scmp.eq.s32.totalorder %s280, 0
      %s283 = sadd.s32 %s282, 1
      %s284 = scalar_select %p281, %s282, %s283
      %p287 = pneg %p281
      %p288 = scmp.eq.s32.totalorder %s19, 1
      %p289 = por %p287, %p288
      %p290 = scmp.ne.s32.totalorder %s282, %s285
      %p291 = scmp.eq.s32.totalorder %s19, 0
      %p292 = por %p290, %p291
      %p293 = scmp.ne.s32.totalorder %s282, %s285
      %p294 = scmp.eq.s32.totalorder %s24, 1
      %p295 = por %p293, %p294
      %p296 = scmp.ne.s32.totalorder %s285, %s286
      %p297 = scmp.eq.s32.totalorder %s24, 0
      %p298 = por %p296, %p297
      %p299 = scmp.ne.s32.totalorder %s285, %s286
      %p300 = scmp.eq.s32.totalorder %s25, 1
      %p301 = por %p299, %p300
      %p303 = scmp.ne.s32.totalorder %s286, %s302
      %p304 = scmp.eq.s32.totalorder %s25, 0
      %p305 = por %p303, %p304
      %p306 = scmp.le.s32.totalorder 1, %s19
      %p307 = scmp.lt.s32.totalorder %s19, 3
      %p308 = pnand %p306, %p307
      %p309 = pneg %p308
      // Predicated region
      $region9: #{tpu_custom_call.1} parent=5 // pred_check
        _
      $region10: #{tpu_custom_call.1} parent=5 // pred_check_branch
        %311 = sbr.rel (%p308) target = $region12
      $region11: #{tpu_custom_call.1} parent=5 // pred_region
        %s312 = ssub.s32 %s19, 1
        // Predicated region
        $region13: #{tpu_custom_call.1} parent=11 // pred_check
          %p313 = pneg %p85
        $region14: #{tpu_custom_call.1} parent=11 // pred_check_branch
          %315 = sbr.rel (%p313) target = $region16
        $region15: #{tpu_custom_call.1} parent=11 // pred_region
          %p316 = scmp.lt.s32.totalorder %s28, 1
          %s317 = scalar_select %p316, %s28, 1
          %s318 = smul.addr %s317, 8
          %s319 = scalar_lea.vmem %s1, %s318
        $region16: #{tpu_custom_call.1} parent=11 // pred_fallthru
          _
        // Predicated region
        $region17: #{tpu_custom_call.1} parent=11 // pred_check
          %p320 = pneg %p111
        $region18: #{tpu_custom_call.1} parent=11 // pred_check_branch
          %322 = sbr.rel (%p320) target = $region20
        $region19: #{tpu_custom_call.1} parent=11 // pred_region
          %p323 = scmp.lt.s32.totalorder %s28, 1
          %s324 = scalar_select %p323, %s28, 1
          %s325 = smul.addr %s324, 8
          %s326 = scalar_lea.vmem %s2, %s325
        $region20: #{tpu_custom_call.1} parent=11 // pred_fallthru
          _
        // Predicated region
        $region21: #{tpu_custom_call.1} parent=11 // pred_check
          %p327 = pneg %p165
        $region22: #{tpu_custom_call.1} parent=11 // pred_check_branch
          %329 = sbr.rel (%p327) target = $region24
        $region23: #{tpu_custom_call.1} parent=11 // pred_region
          %p330 = scmp.lt.s32.totalorder %s28, 1
          %s331 = scalar_select %p330, %s28, 1
          %s332 = smul.addr %s331, 2
          %s333 = smul.addr %s332, 8
          %s334 = scalar_lea.vmem %s4, %s333
        $region24: #{tpu_custom_call.1} parent=11 // pred_fallthru
          _
        // Predicated region
        $region25: #{tpu_custom_call.1} parent=11 // pred_check
          %p335 = pneg %p186
        $region26: #{tpu_custom_call.1} parent=11 // pred_check_branch
          %337 = sbr.rel (%p335) target = $region28
        $region27: #{tpu_custom_call.1} parent=11 // pred_region
          _
        $region28: #{tpu_custom_call.1} parent=11 // pred_fallthru
          _
        // Predicated region
        $region29: #{tpu_custom_call.1} parent=11 // pred_check
          %p338 = pneg %p207
        $region30: #{tpu_custom_call.1} parent=11 // pred_check_branch
          %340 = sbr.rel (%p338) target = $region32
        $region31: #{tpu_custom_call.1} parent=11 // pred_region
          _
        $region32: #{tpu_custom_call.1} parent=11 // pred_fallthru
          _
        // Predicated region
        $region33: #{tpu_custom_call.1} parent=11 // pred_check
          %p341 = pneg %p228
        $region34: #{tpu_custom_call.1} parent=11 // pred_check_branch
          %343 = sbr.rel (%p341) target = $region36
        $region35: #{tpu_custom_call.1} parent=11 // pred_region
          _
        $region36: #{tpu_custom_call.1} parent=11 // pred_fallthru
          _
        // Predicated region
        $region37: #{tpu_custom_call.1} parent=11 // pred_check
          %p344 = pneg %p249
        $region38: #{tpu_custom_call.1} parent=11 // pred_check_branch
          %346 = sbr.rel (%p344) target = $region40
        $region39: #{tpu_custom_call.1} parent=11 // pred_region
          _
        $region40: #{tpu_custom_call.1} parent=11 // pred_fallthru
          _
        // Predicated region
        $region41: #{tpu_custom_call.1} parent=11 // pred_check
          %p347 = pneg %p270
        $region42: #{tpu_custom_call.1} parent=11 // pred_check_branch
          %349 = sbr.rel (%p347) target = $region44
        $region43: #{tpu_custom_call.1} parent=11 // pred_region
          _
        $region44: #{tpu_custom_call.1} parent=11 // pred_fallthru
          _
      $region12: #{tpu_custom_call.1} parent=5 // pred_fallthru
        _
      %p350 = scmp.lt.s32.totalorder %s19, 2
      // Predicated region
      $region45: #{tpu_custom_call.1} parent=5 // pred_check
        %p351 = pneg %p350
      $region46: #{tpu_custom_call.1} parent=5 // pred_check_branch
        %353 = sbr.rel (%p351) target = $region48
      $region47: #{tpu_custom_call.1} parent=5 // pred_region
        // Predicated region
        $region49: #{tpu_custom_call.1} parent=47 // pred_check
          %p354 = pneg %p53
        $region50: #{tpu_custom_call.1} parent=47 // pred_check_branch
          %356 = sbr.rel (%p354) target = $region52
        $region51: #{tpu_custom_call.1} parent=47 // pred_region
          %p357 = scmp.lt.s32.totalorder %s26, 1
          %s358 = scalar_select %p357, %s26, 1
          %p359 = scmp.lt.s32.totalorder %s27, 0
          %s360 = scalar_select %p359, %s27, 0
          %s361 = sadd.s32 %s360, %s358
          %s362 = smul.addr %s361, 4
          %s363 = scalar_lea.vmem %s0, %s362
        $region52: #{tpu_custom_call.1} parent=47 // pred_fallthru
          _
        // Predicated region
        $region53: #{tpu_custom_call.1} parent=47 // pred_check
          %p364 = pneg %p133
        $region54: #{tpu_custom_call.1} parent=47 // pred_check_branch
          %366 = sbr.rel (%p364) target = $region56
        $region55: #{tpu_custom_call.1} parent=47 // pred_region
          %p367 = scmp.lt.s32.totalorder %s26, 1
          %s368 = scalar_select %p367, %s26, 1
          %p369 = scmp.lt.s32.totalorder %s27, 0
          %s370 = scalar_select %p369, %s27, 0
          %s371 = sadd.s32 %s370, %s368
          %s372 = smul.addr %s371, 8
          %s373 = scalar_lea.vmem %s3, %s372
        $region56: #{tpu_custom_call.1} parent=47 // pred_fallthru
          _
      $region48: #{tpu_custom_call.1} parent=5 // pred_fallthru
        _
      %p374 = scmp.le.s32.totalorder 1, %s19
      %p375 = scmp.lt.s32.totalorder %s19, 3
      %p376 = pnand %p374, %p375
      %p377 = pneg %p376
      // Predicated region
      $region57: #{tpu_custom_call.1} parent=5 // pred_check
        _
      $region58: #{tpu_custom_call.1} parent=5 // pred_check_branch
        %379 = sbr.rel (%p376) target = $region60
      $region59: #{tpu_custom_call.1} parent=5 // pred_region
        %s380 = ssub.s32 %s19, 1
        %p381 = scmp.lt.s32.totalorder %s28, 1
        %s382 = scalar_select %p381, %s28, 1
        %p383 = scmp.lt.s32.totalorder %s29, 0
        %s384 = scalar_select %p383, %s29, 0
        %s385 = sadd.s32 %s384, %s382
        %s386 = smul.addr %s385, 4
        %s387 = scalar_lea.vmem %s0, %s386
        %p388 = pneg %p59
        %p389 = pneg %p56
        %p390 = scmp.lt.s32.totalorder %s28, 1
        %s391 = scalar_select %p390, %s28, 1
        %s392 = smul.addr %s391, 8
        %s393 = scalar_lea.vmem %s1, %s392
        %p394 = pneg %p85
        %p395 = pneg %p82
        %p396 = scmp.lt.s32.totalorder %s28, 1
        %s397 = scalar_select %p396, %s28, 1
        %s398 = smul.addr %s397, 8
        %s399 = scalar_lea.vmem %s2, %s398
        %p400 = pneg %p111
        %p401 = pneg %p108
        %p402 = scmp.lt.s32.totalorder %s28, 1
        %s403 = scalar_select %p402, %s28, 1
        %p404 = scmp.lt.s32.totalorder %s29, 0
        %s405 = scalar_select %p404, %s29, 0
        %s406 = sadd.s32 %s405, %s403
        %s407 = smul.addr %s406, 8
        %s408 = scalar_lea.vmem %s3, %s407
        %p409 = pneg %p139
        %p410 = pneg %p136
        %p411 = scmp.lt.s32.totalorder %s28, 1
        %s412 = scalar_select %p411, %s28, 1
        %s413 = smul.addr %s412, 2
        %s414 = smul.addr %s413, 8
        %s415 = scalar_lea.vmem %s4, %s414
        %p416 = pneg %p165
        %p417 = pneg %p162
        %p418 = pneg %p186
        %p419 = pneg %p183
        %p420 = pneg %p207
        %p421 = pneg %p204
        %p422 = pneg %p228
        %p423 = pneg %p225
        %p424 = pneg %p249
        %p425 = pneg %p246
        %p426 = pneg %p270
        %p427 = pneg %p267
        %p428 = pneg %p298
        %p429 = pneg %p295
        %s430 = sand.u32 %s285, 1
        %s431 = scalar_lea.sflag [#allocation3], %s430
        %s432 = sand.u32 %s285, 1
        %s433 = smul.addr %s432, 16
        %s434 = scalar_lea.vmem [#allocation2], %s433
        %p435 = scmp.lt.s32.totalorder %s28, 1
        %s436 = scalar_select %p435, %s28, 1
        %p437 = scmp.lt.s32.totalorder %s29, 0
        %s438 = scalar_select %p437, %s29, 0
        %s439 = sadd.s32 %s438, %s436
        %s440 = smul.addr %s439, 4
        %s441 = scalar_lea.vmem %s0, %s440
        %p442 = scmp.lt.s32.totalorder %s28, 1
        %s443 = scalar_select %p442, %s28, 1
        %s444 = smul.addr %s443, 8
        %s445 = scalar_lea.vmem %s1, %s444
        %p446 = scmp.lt.s32.totalorder %s28, 1
        %s447 = scalar_select %p446, %s28, 1
        %s448 = smul.addr %s447, 8
        %s449 = scalar_lea.vmem %s2, %s448
        %p450 = scmp.lt.s32.totalorder %s28, 1
        %s451 = scalar_select %p450, %s28, 1
        %p452 = scmp.lt.s32.totalorder %s29, 0
        %s453 = scalar_select %p452, %s29, 0
        %s454 = sadd.s32 %s453, %s451
        %s455 = smul.addr %s454, 8
        %s456 = scalar_lea.vmem %s3, %s455
        %p457 = scmp.lt.s32.totalorder %s28, 1
        %s458 = scalar_select %p457, %s28, 1
        %s459 = smul.addr %s458, 2
        %s460 = smul.addr %s459, 8
        %s461 = scalar_lea.vmem %s4, %s460
        %v462 = vld [vmem:[%s441] sm:$0x7]
        %v463 = vld [vmem:[%s445] sm:$0xff]
        %v464 = vld [vmem:[%s449] sm:$0xff]
        %v465 = vld [vmem:[%s456] sm:$0x3f]
        %v466 = vld [vmem:[%s461] sm:$0xff]
        %v467 = vld [vmem:[%s461 + $0x8] sm:$0x3]
        %vm468 = vcmask 23552
        %v470 = vsel %vm468, %v463, 0
        %vm472 = vcmask 1042432
        %v474 = vsel %vm472, %v462, 0
        %476 = vmatprep.subr.mxu0 0.0
        %477 = vmatpush1.msra.mxu0 0.0
        %478 = vmatprep.subr.mxu0 0.0
        %479 = vmatpush1.msra.mxu0 0.0
        %480 = vmatprep.subr.mxu0 0.0
        %481 = vmatpush1.msra.mxu0 0.0
        %482 = vmatprep.subr.mxu0 0.0
        %483 = vmatpush1.msra.mxu0 0.0
        %484 = vmatprep.subr.mxu0 0.0
        %485 = vmatpush1.msra.mxu0 0.0
        %486 = vmatprep.subr.mxu0 0.0
        %487 = vmatpush1.msra.mxu0 0.0
        %488 = vmatprep.subr.mxu0 0.0
        %489 = vmatpush1.msra.mxu0 0.0
        %490 = vmatprep.subr.mxu0 0.0
        %491 = vmatpush1.msra.mxu0 0.0
        %492 = vmatprep.subr.mxu0 0.0
        %493 = vmatpush1.msra.mxu0 0.0
        %494 = vmatprep.subr.mxu0 0.0
        %495 = vmatpush1.msra.mxu0 0.0
        %496 = vmatprep.subr.mxu0 0.0
        %497 = vmatpush1.msra.mxu0 0.0
        %498 = vmatprep.subr.mxu0 0.0
        %499 = vmatpush1.msra.mxu0 0.0
        %500 = vmatprep.subr.mxu0 0.0
        %501 = vmatpush1.msra.mxu0 0.0
        %502 = vmatprep.subr.mxu0 0.0
        %503 = vmatpush1.msra.mxu0 0.0
        %504 = vmatprep.subr.mxu0 0.0
        %505 = vmatpush1.msra.mxu0 0.0
        %506 = vmatprep.subr.mxu0 0.0
        %507 = vmatpush1.msra.mxu0 %v474
        %508 = vmatprep.subr.mxu0 0.0
        %509 = vmatpush2.msra.mxu0 0.0
        %510 = vmatprep.subr.mxu0 0.0
        %511 = vmatpush2.msra.mxu0 0.0
        %512 = vmatprep.subr.mxu0 0.0
        %513 = vmatpush2.msra.mxu0 0.0
        %514 = vmatprep.subr.mxu0 0.0
        %515 = vmatpush2.msra.mxu0 0.0
        %516 = vmatprep.subr.mxu0 0.0
        %517 = vmatpush2.msra.mxu0 0.0
        %518 = vmatprep.subr.mxu0 0.0
        %519 = vmatpush2.msra.mxu0 0.0
        %520 = vmatprep.subr.mxu0 0.0
        %521 = vmatpush2.msra.mxu0 0.0
        %522 = vmatprep.subr.mxu0 0.0
        %523 = vmatpush2.msra.mxu0 0.0
        %524 = vmatprep.subr.mxu0 0.0
        %525 = vmatpush2.msra.mxu0 0.0
        %526 = vmatprep.subr.mxu0 0.0
        %527 = vmatpush2.msra.mxu0 0.0
        %528 = vmatprep.subr.mxu0 0.0
        %529 = vmatpush2.msra.mxu0 0.0
        %530 = vmatprep.subr.mxu0 0.0
        %531 = vmatpush2.msra.mxu0 0.0
        %532 = vmatprep.subr.mxu0 0.0
        %533 = vmatpush2.msra.mxu0 0.0
        %534 = vmatprep.subr.mxu0 0.0
        %535 = vmatpush2.msra.mxu0 0.0
        %536 = vmatprep.subr.mxu0 0.0
        %537 = vmatpush2.msra.mxu0 0.0
        %538 = vmatprep.subr.mxu0 0.0
        %539 = vmatpush2.msra.mxu0 0.0
        %540 = vmatprep.mubr.f32.mxu0 0.0
        %541 = vmatmul.mubr.f32.gmra.mxu0 %v470
        %v542 = vpop.f32.mrf.mxu0
        %v543 = vadd.f32 0.0, %v542
        %v544 = vpop.f32.mrf.mxu0
        %545 = vdwg.mxu0
        %v546 = vmul.f32 %v543, -2.0
        %548 = vset.pattern.permute.xlu0 0
        %549 = vperm.xlu0 %548, %v464
        %v550 = vpop.permute.xlu0 %549
        %v552 = vadd.f32 %v546, %v550
        %v553 = vmul.f32 %v462, %v462
        %v554 = vsel %vm472, %v553, 0.0
        %v555 = vrot.slane %v554, 4
        %v556 = vadd.f32 %v554, %v555
        %v557 = vrot.slane %v556, 2
        %v558 = vadd.f32 %v556, %v557
        %v559 = vrot.slane %v558, 1
        %v560 = vadd.f32 %v558, %v559
        %v561 = vadd.f32 %v552, %v560
        %v562 = vrot.slane %v561, 4
        %v563 = vmin.f32 %v561, %v562
        %v564 = vrot.slane %v563, 2
        %v565 = vmin.f32 %v563, %v564
        %v566 = vrot.slane %v565, 1
        %v567 = vmin.f32 %v565, %v566
        %vm568 = vcmp.eq.f32.partialorder %v561, %v567
        %v569 = vadd.f32 %v567, 1e-08
        %v570 = vrcp.pop %v569
        %v571 = vmul.f32 1.0, %v570
        %v572 = vsel %vm568, %v571, 0.0
        %v573 = vadd.f32 %v572, 0.0
        %v574 = vadd.f32 %v571, 0.0
        %v575 = vsel %vm568, inf, %v561
        %v576 = vrot.slane %v575, 4
        %v577 = vmin.f32 %v575, %v576
        %v578 = vrot.slane %v577, 2
        %v579 = vmin.f32 %v577, %v578
        %v580 = vrot.slane %v579, 1
        %v581 = vmin.f32 %v579, %v580
        %vm582 = vcmp.eq.f32.partialorder %v575, %v581
        %v583 = vadd.f32 %v581, 1e-08
        %v584 = vrcp.pop %v583
        %v585 = vmul.f32 1.0, %v584
        %v586 = vsel %vm582, %v585, 0.0
        %v587 = vadd.f32 %v573, %v586
        %v588 = vadd.f32 %v574, %v585
        %v589 = vsel %vm582, inf, %v575
        %v590 = vrot.slane %v589, 4
        %v591 = vmin.f32 %v589, %v590
        %v592 = vrot.slane %v591, 2
        %v593 = vmin.f32 %v591, %v592
        %v594 = vrot.slane %v593, 1
        %v595 = vmin.f32 %v593, %v594
        %vm596 = vcmp.eq.f32.partialorder %v589, %v595
        %v597 = vadd.f32 %v595, 1e-08
        %v598 = vrcp.pop %v597
        %v599 = vmul.f32 1.0, %v598
        %v600 = vsel %vm596, %v599, 0.0
        %v601 = vadd.f32 %v587, %v600
        %v602 = vadd.f32 %v588, %v599
        %vm603 = vcmask 64512
        %v605 = vsel %vm603, %v466, 0
        %v608 = vsel %vm603, %v467, 0
        %610 = vmatprep.subr.mxu0 0.0
        %611 = vmatpush1.msra.mxu0 0.0
        %612 = vmatprep.subr.mxu0 0.0
        %613 = vmatpush1.msra.mxu0 0.0
        %614 = vmatprep.subr.mxu0 0.0
        %615 = vmatpush1.msra.mxu0 0.0
        %616 = vmatprep.subr.mxu0 0.0
        %617 = vmatpush1.msra.mxu0 0.0
        %618 = vmatprep.subr.mxu0 0.0
        %619 = vmatpush1.msra.mxu0 0.0
        %620 = vmatprep.subr.mxu0 0.0
        %621 = vmatpush1.msra.mxu0 0.0
        %622 = vmatprep.subr.mxu0 0.0
        %623 = vmatpush1.msra.mxu0 0.0
        %624 = vmatprep.subr.mxu0 0.0
        %625 = vmatpush1.msra.mxu0 0.0
        %626 = vmatprep.subr.mxu0 0.0
        %627 = vmatpush1.msra.mxu0 0.0
        %628 = vmatprep.subr.mxu0 0.0
        %629 = vmatpush1.msra.mxu0 0.0
        %630 = vmatprep.subr.mxu0 0.0
        %631 = vmatpush1.msra.mxu0 0.0
        %632 = vmatprep.subr.mxu0 0.0
        %633 = vmatpush1.msra.mxu0 0.0
        %634 = vmatprep.subr.mxu0 0.0
        %635 = vmatpush1.msra.mxu0 0.0
        %636 = vmatprep.subr.mxu0 0.0
        %637 = vmatpush1.msra.mxu0 0.0
        %638 = vmatprep.subr.mxu0 0.0
        %639 = vmatpush1.msra.mxu0 0.0
        %640 = vmatprep.subr.mxu0 0.0
        %641 = vmatpush1.msra.mxu0 %v601
        %642 = vmatprep.subr.mxu0 0.0
        %643 = vmatpush2.msra.mxu0 0.0
        %644 = vmatprep.subr.mxu0 0.0
        %645 = vmatpush2.msra.mxu0 0.0
        %646 = vmatprep.subr.mxu0 0.0
        %647 = vmatpush2.msra.mxu0 0.0
        %648 = vmatprep.subr.mxu0 0.0
        %649 = vmatpush2.msra.mxu0 0.0
        %650 = vmatprep.subr.mxu0 0.0
        %651 = vmatpush2.msra.mxu0 0.0
        %652 = vmatprep.subr.mxu0 0.0
        %653 = vmatpush2.msra.mxu0 0.0
        %654 = vmatprep.subr.mxu0 0.0
        %655 = vmatpush2.msra.mxu0 0.0
        %656 = vmatprep.subr.mxu0 0.0
        %657 = vmatpush2.msra.mxu0 0.0
        %658 = vmatprep.subr.mxu0 0.0
        %659 = vmatpush2.msra.mxu0 0.0
        %660 = vmatprep.subr.mxu0 0.0
        %661 = vmatpush2.msra.mxu0 0.0
        %662 = vmatprep.subr.mxu0 0.0
        %663 = vmatpush2.msra.mxu0 0.0
        %664 = vmatprep.subr.mxu0 0.0
        %665 = vmatpush2.msra.mxu0 0.0
        %666 = vmatprep.subr.mxu0 0.0
        %667 = vmatpush2.msra.mxu0 0.0
        %668 = vmatprep.subr.mxu0 0.0
        %669 = vmatpush2.msra.mxu0 0.0
        %670 = vmatprep.subr.mxu0 0.0
        %671 = vmatpush2.msra.mxu0 0.0
        %672 = vmatprep.subr.mxu0 0.0
        %673 = vmatpush2.msra.mxu0 0.0
        %674 = vmatprep.mubr.f32.mxu0 0.0
        %675 = vmatmul.mubr.f32.gmra.mxu0 %v605
        %v676 = vpop.f32.mrf.mxu0
        %v677 = vadd.f32 0.0, %v676
        %v678 = vpop.f32.mrf.mxu0
        %679 = vmatprep.mubr.f32.mxu0 0.0
        %680 = vmatmul.mubr.f32.gmra.mxu0 %v608
        %v681 = vpop.f32.mrf.mxu0
        %v682 = vadd.f32 0.0, %v681
        %v683 = vpop.f32.mrf.mxu0
        %684 = vdwg.mxu0
        %v685 = vrcp.pop %v602
        %v686 = vmul.f32 %v677, %v685
        %v687 = vmul.f32 %v682, %v685
        %v688 = vld [vmem:[%s5] sm:$0xff]
        %v689 = vld [vmem:[%s5 + $0x8] sm:$0xff]
        %v690 = vld [vmem:[%s5 + $0x10] sm:$0xff]
        %v691 = vld [vmem:[%s5 + $0x18] sm:$0xff]
        %v692 = vld [vmem:[%s6] sm:$0xff]
        %v693 = vld [vmem:[%s6 + $0x8] sm:$0xff]
        %v694 = vld [vmem:[%s6 + $0x10] sm:$0xff]
        %v695 = vld [vmem:[%s6 + $0x18] sm:$0xff]
        %vm696 = vcmask 80896
        %v698 = vsel %vm696, %v692, 0
        %v701 = vsel %vm696, %v693, 0
        %v704 = vsel %vm696, %v694, 0
        %v707 = vsel %vm696, %v695, 0
        %vm709 = vcmask 1041408
        %v711 = vsel %vm709, %v687, 0
        %713 = vmatprep.subr.mxu0 0.0
        %714 = vmatpush1.msra.mxu0 0.0
        %715 = vmatprep.subr.mxu0 0.0
        %716 = vmatpush1.msra.mxu0 0.0
        %717 = vmatprep.subr.mxu0 0.0
        %718 = vmatpush1.msra.mxu0 0.0
        %719 = vmatprep.subr.mxu0 0.0
        %720 = vmatpush1.msra.mxu0 0.0
        %721 = vmatprep.subr.mxu0 0.0
        %722 = vmatpush1.msra.mxu0 0.0
        %723 = vmatprep.subr.mxu0 0.0
        %724 = vmatpush1.msra.mxu0 0.0
        %725 = vmatprep.subr.mxu0 0.0
        %726 = vmatpush1.msra.mxu0 0.0
        %727 = vmatprep.subr.mxu0 0.0
        %728 = vmatpush1.msra.mxu0 0.0
        %729 = vmatprep.subr.mxu0 0.0
        %730 = vmatpush1.msra.mxu0 0.0
        %731 = vmatprep.subr.mxu0 0.0
        %732 = vmatpush1.msra.mxu0 0.0
        %733 = vmatprep.subr.mxu0 0.0
        %734 = vmatpush1.msra.mxu0 0.0
        %735 = vmatprep.subr.mxu0 0.0
        %736 = vmatpush1.msra.mxu0 0.0
        %737 = vmatprep.subr.mxu0 0.0
        %738 = vmatpush1.msra.mxu0 0.0
        %739 = vmatprep.subr.mxu0 0.0
        %740 = vmatpush1.msra.mxu0 0.0
        %741 = vmatprep.subr.mxu0 0.0
        %742 = vmatpush1.msra.mxu0 %v711
        %743 = vmatprep.subr.mxu0 0.0
        %744 = vmatpush1.msra.mxu0 %v686
        %745 = vmatprep.subr.mxu0 0.0
        %746 = vmatpush2.msra.mxu0 0.0
        %747 = vmatprep.subr.mxu0 0.0
        %748 = vmatpush2.msra.mxu0 0.0
        %749 = vmatprep.subr.mxu0 0.0
        %750 = vmatpush2.msra.mxu0 0.0
        %751 = vmatprep.subr.mxu0 0.0
        %752 = vmatpush2.msra.mxu0 0.0
        %753 = vmatprep.subr.mxu0 0.0
        %754 = vmatpush2.msra.mxu0 0.0
        %755 = vmatprep.subr.mxu0 0.0
        %756 = vmatpush2.msra.mxu0 0.0
        %757 = vmatprep.subr.mxu0 0.0
        %758 = vmatpush2.msra.mxu0 0.0
        %759 = vmatprep.subr.mxu0 0.0
        %760 = vmatpush2.msra.mxu0 0.0
        %761 = vmatprep.subr.mxu0 0.0
        %762 = vmatpush2.msra.mxu0 0.0
        %763 = vmatprep.subr.mxu0 0.0
        %764 = vmatpush2.msra.mxu0 0.0
        %765 = vmatprep.subr.mxu0 0.0
        %766 = vmatpush2.msra.mxu0 0.0
        %767 = vmatprep.subr.mxu0 0.0
        %768 = vmatpush2.msra.mxu0 0.0
        %769 = vmatprep.subr.mxu0 0.0
        %770 = vmatpush2.msra.mxu0 0.0
        %771 = vmatprep.subr.mxu0 0.0
        %772 = vmatpush2.msra.mxu0 0.0
        %773 = vmatprep.subr.mxu0 0.0
        %774 = vmatpush2.msra.mxu0 0.0
        %775 = vmatprep.subr.mxu0 0.0
        %776 = vmatpush2.msra.mxu0 0.0
        %777 = vmatprep.mubr.f32.mxu0 0.0
        %778 = vmatmul.mubr.f32.gmra.mxu0 %v698
        %v779 = vpop.f32.mrf.mxu0
        %v780 = vadd.f32 0.0, %v779
        %v781 = vpop.f32.mrf.mxu0
        %782 = vmatprep.mubr.f32.mxu0 0.0
        %783 = vmatmul.mubr.f32.gmra.mxu0 %v701
        %v784 = vpop.f32.mrf.mxu0
        %v785 = vadd.f32 0.0, %v784
        %v786 = vpop.f32.mrf.mxu0
        %787 = vmatprep.mubr.f32.mxu0 0.0
        %788 = vmatmul.mubr.f32.gmra.mxu0 %v704
        %v789 = vpop.f32.mrf.mxu0
        %v790 = vadd.f32 0.0, %v789
        %v791 = vpop.f32.mrf.mxu0
        %792 = vmatprep.mubr.f32.mxu0 0.0
        %793 = vmatmul.mubr.f32.gmra.mxu0 %v707
        %v794 = vpop.f32.mrf.mxu0
        %v795 = vadd.f32 0.0, %v794
        %v796 = vpop.f32.mrf.mxu0
        %797 = vdwg.mxu0
        %vm798 = vcmask 48128
        %v800 = vsel %vm798, %v688, 0
        %v803 = vsel %vm798, %v689, 0
        %v806 = vsel %vm798, %v690, 0
        %v809 = vsel %vm798, %v691, 0
        %vm811 = vcmask 1045504
        %v813 = vsel %vm811, %v465, 0
        %815 = vmatprep.subr.mxu0 0.0
        %816 = vmatpush1.msra.mxu0 0.0
        %817 = vmatprep.subr.mxu0 0.0
        %818 = vmatpush1.msra.mxu0 0.0
        %819 = vmatprep.subr.mxu0 0.0
        %820 = vmatpush1.msra.mxu0 0.0
        %821 = vmatprep.subr.mxu0 0.0
        %822 = vmatpush1.msra.mxu0 0.0
        %823 = vmatprep.subr.mxu0 0.0
        %824 = vmatpush1.msra.mxu0 0.0
        %825 = vmatprep.subr.mxu0 0.0
        %826 = vmatpush1.msra.mxu0 0.0
        %827 = vmatprep.subr.mxu0 0.0
        %828 = vmatpush1.msra.mxu0 0.0
        %829 = vmatprep.subr.mxu0 0.0
        %830 = vmatpush1.msra.mxu0 0.0
        %831 = vmatprep.subr.mxu0 0.0
        %832 = vmatpush1.msra.mxu0 0.0
        %833 = vmatprep.subr.mxu0 0.0
        %834 = vmatpush1.msra.mxu0 0.0
        %835 = vmatprep.subr.mxu0 0.0
        %836 = vmatpush1.msra.mxu0 0.0
        %837 = vmatprep.subr.mxu0 0.0
        %838 = vmatpush1.msra.mxu0 0.0
        %839 = vmatprep.subr.mxu0 0.0
        %840 = vmatpush1.msra.mxu0 0.0
        %841 = vmatprep.subr.mxu0 0.0
        %842 = vmatpush1.msra.mxu0 0.0
        %843 = vmatprep.subr.mxu0 0.0
        %844 = vmatpush1.msra.mxu0 0.0
        %845 = vmatprep.subr.mxu0 0.0
        %846 = vmatpush1.msra.mxu0 %v813
        %847 = vmatprep.subr.mxu0 0.0
        %848 = vmatpush2.msra.mxu0 0.0
        %849 = vmatprep.subr.mxu0 0.0
        %850 = vmatpush2.msra.mxu0 0.0
        %851 = vmatprep.subr.mxu0 0.0
        %852 = vmatpush2.msra.mxu0 0.0
        %853 = vmatprep.subr.mxu0 0.0
        %854 = vmatpush2.msra.mxu0 0.0
        %855 = vmatprep.subr.mxu0 0.0
        %856 = vmatpush2.msra.mxu0 0.0
        %857 = vmatprep.subr.mxu0 0.0
        %858 = vmatpush2.msra.mxu0 0.0
        %859 = vmatprep.subr.mxu0 0.0
        %860 = vmatpush2.msra.mxu0 0.0
        %861 = vmatprep.subr.mxu0 0.0
        %862 = vmatpush2.msra.mxu0 0.0
        %863 = vmatprep.subr.mxu0 0.0
        %864 = vmatpush2.msra.mxu0 0.0
        %865 = vmatprep.subr.mxu0 0.0
        %866 = vmatpush2.msra.mxu0 0.0
        %867 = vmatprep.subr.mxu0 0.0
        %868 = vmatpush2.msra.mxu0 0.0
        %869 = vmatprep.subr.mxu0 0.0
        %870 = vmatpush2.msra.mxu0 0.0
        %871 = vmatprep.subr.mxu0 0.0
        %872 = vmatpush2.msra.mxu0 0.0
        %873 = vmatprep.subr.mxu0 0.0
        %874 = vmatpush2.msra.mxu0 0.0
        %875 = vmatprep.subr.mxu0 0.0
        %876 = vmatpush2.msra.mxu0 0.0
        %877 = vmatprep.subr.mxu0 0.0
        %878 = vmatpush2.msra.mxu0 0.0
        %879 = vmatprep.mubr.f32.mxu0 0.0
        %880 = vmatmul.mubr.f32.gmra.mxu0 %v800
        %v881 = vpop.f32.mrf.mxu0
        %v882 = vadd.f32 %v780, %v881
        %v883 = vpop.f32.mrf.mxu0
        %884 = vmatprep.mubr.f32.mxu0 0.0
        %885 = vmatmul.mubr.f32.gmra.mxu0 %v803
        %v886 = vpop.f32.mrf.mxu0
        %v887 = vadd.f32 %v785, %v886
        %v888 = vpop.f32.mrf.mxu0
        %889 = vmatprep.mubr.f32.mxu0 0.0
        %890 = vmatmul.mubr.f32.gmra.mxu0 %v806
        %v891 = vpop.f32.mrf.mxu0
        %v892 = vadd.f32 %v790, %v891
        %v893 = vpop.f32.mrf.mxu0
        %894 = vmatprep.mubr.f32.mxu0 0.0
        %895 = vmatmul.mubr.f32.gmra.mxu0 %v809
        %v896 = vpop.f32.mrf.mxu0
        %v897 = vadd.f32 %v795, %v896
        %v898 = vpop.f32.mrf.mxu0
        %899 = vdwg.mxu0
        %v900 = vld [vmem:[%s7] sm:$0xff]
        %v901 = vld [vmem:[%s7 + $0x8] sm:$0xff]
        %v902 = vld [vmem:[%s7 + $0x10] sm:$0xff]
        %v903 = vld [vmem:[%s7 + $0x18] sm:$0xff]
        %905 = vset.pattern.permute.xlu0 0
        %906 = vperm.xlu0 %905, %v900
        %v907 = vpop.permute.xlu0 %906
        %910 = vset.pattern.permute.xlu0 0
        %911 = vperm.xlu0 %910, %v901
        %v912 = vpop.permute.xlu0 %911
        %915 = vset.pattern.permute.xlu0 0
        %916 = vperm.xlu0 %915, %v902
        %v917 = vpop.permute.xlu0 %916
        %920 = vset.pattern.permute.xlu0 0
        %921 = vperm.xlu0 %920, %v903
        %v922 = vpop.permute.xlu0 %921
        %v924 = vadd.f32 %v882, %v907
        %v925 = vadd.f32 %v887, %v912
        %v926 = vadd.f32 %v892, %v917
        %v927 = vadd.f32 %v897, %v922
        %v928 = vmax.f32 %v924, 0.0
        %v929 = vmax.f32 %v925, 0.0
        %v930 = vmax.f32 %v926, 0.0
        %v931 = vmax.f32 %v927, 0.0
        %v932 = vld [vmem:[%s8] sm:$0xff]
        %v933 = vld [vmem:[%s8 + $0x8] sm:$0xff]
        %v934 = vld [vmem:[%s9] sm:$0xff]
        %v935 = vld [vmem:[%s9 + $0x8] sm:$0xff]
        %937 = vset.pattern.permute.xlu0 0
        %938 = vperm.xlu0 %937, %v934
        %v939 = vpop.permute.xlu0 %938
        %942 = vset.pattern.permute.xlu0 0
        %943 = vperm.xlu0 %942, %v935
        %v944 = vpop.permute.xlu0 %943
        %vm946 = vcmask 261120
        %v948 = vsel %vm946, %v932, 0
        %v951 = vsel %vm946, %v933, 0
        %953 = vmatprep.subr.mxu0 0.0
        %954 = vmatpush1.msra.mxu0 0.0
        %955 = vmatprep.subr.mxu0 0.0
        %956 = vmatpush1.msra.mxu0 0.0
        %957 = vmatprep.subr.mxu0 0.0
        %958 = vmatpush1.msra.mxu0 0.0
        %959 = vmatprep.subr.mxu0 0.0
        %960 = vmatpush1.msra.mxu0 0.0
        %961 = vmatprep.subr.mxu0 0.0
        %962 = vmatpush1.msra.mxu0 0.0
        %963 = vmatprep.subr.mxu0 0.0
        %964 = vmatpush1.msra.mxu0 0.0
        %965 = vmatprep.subr.mxu0 0.0
        %966 = vmatpush1.msra.mxu0 0.0
        %967 = vmatprep.subr.mxu0 0.0
        %968 = vmatpush1.msra.mxu0 0.0
        %969 = vmatprep.subr.mxu0 0.0
        %970 = vmatpush1.msra.mxu0 0.0
        %971 = vmatprep.subr.mxu0 0.0
        %972 = vmatpush1.msra.mxu0 0.0
        %973 = vmatprep.subr.mxu0 0.0
        %974 = vmatpush1.msra.mxu0 0.0
        %975 = vmatprep.subr.mxu0 0.0
        %976 = vmatpush1.msra.mxu0 0.0
        %977 = vmatprep.subr.mxu0 0.0
        %978 = vmatpush1.msra.mxu0 %v931
        %979 = vmatprep.subr.mxu0 0.0
        %980 = vmatpush1.msra.mxu0 %v930
        %981 = vmatprep.subr.mxu0 0.0
        %982 = vmatpush1.msra.mxu0 %v929
        %983 = vmatprep.subr.mxu0 0.0
        %984 = vmatpush1.msra.mxu0 %v928
        %985 = vmatprep.subr.mxu0 0.0
        %986 = vmatpush2.msra.mxu0 0.0
        %987 = vmatprep.subr.mxu0 0.0
        %988 = vmatpush2.msra.mxu0 0.0
        %989 = vmatprep.subr.mxu0 0.0
        %990 = vmatpush2.msra.mxu0 0.0
        %991 = vmatprep.subr.mxu0 0.0
        %992 = vmatpush2.msra.mxu0 0.0
        %993 = vmatprep.subr.mxu0 0.0
        %994 = vmatpush2.msra.mxu0 0.0
        %995 = vmatprep.subr.mxu0 0.0
        %996 = vmatpush2.msra.mxu0 0.0
        %997 = vmatprep.subr.mxu0 0.0
        %998 = vmatpush2.msra.mxu0 0.0
        %999 = vmatprep.subr.mxu0 0.0
        %1000 = vmatpush2.msra.mxu0 0.0
        %1001 = vmatprep.subr.mxu0 0.0
        %1002 = vmatpush2.msra.mxu0 0.0
        %1003 = vmatprep.subr.mxu0 0.0
        %1004 = vmatpush2.msra.mxu0 0.0
        %1005 = vmatprep.subr.mxu0 0.0
        %1006 = vmatpush2.msra.mxu0 0.0
        %1007 = vmatprep.subr.mxu0 0.0
        %1008 = vmatpush2.msra.mxu0 0.0
        %1009 = vmatprep.subr.mxu0 0.0
        %1010 = vmatpush2.msra.mxu0 0.0
        %1011 = vmatprep.subr.mxu0 0.0
        %1012 = vmatpush2.msra.mxu0 0.0
        %1013 = vmatprep.subr.mxu0 0.0
        %1014 = vmatpush2.msra.mxu0 0.0
        %1015 = vmatprep.subr.mxu0 0.0
        %1016 = vmatpush2.msra.mxu0 0.0
        %1017 = vmatprep.mubr.f32.mxu0 0.0
        %1018 = vmatmul.mubr.f32.gmra.mxu0 %v948
        %v1019 = vpop.f32.mrf.mxu0
        %v1020 = vadd.f32 %v939, %v1019
        %v1021 = vpop.f32.mrf.mxu0
        %1022 = vmatprep.mubr.f32.mxu0 0.0
        %1023 = vmatmul.mubr.f32.gmra.mxu0 %v951
        %v1024 = vpop.f32.mrf.mxu0
        %v1025 = vadd.f32 %v944, %v1024
        %v1026 = vpop.f32.mrf.mxu0
        %1027 = vdwg.mxu0
        %v1028 = vmax.f32 %v1020, 0.0
        %v1029 = vmax.f32 %v1025, 0.0
        %1030 = vst [vmem:[%s434] sm:$0xff] %v1028
        %1031 = vst [vmem:[%s434 + $0x8] sm:$0xff] %v1029
        %s1032 = sand.u32 %s285, 1
        %s1033 = scalar_lea.sflag [#allocation3], %s1032
        %s1034 = sand.u32 %s285, 1
        %s1035 = smul.addr %s1034, 16
        %s1036 = scalar_lea.vmem [#allocation2], %s1035
        // Predicated region
        $region61: #{tpu_custom_call.1} parent=59 // pred_check
          %p1037 = pneg %p295
        $region62: #{tpu_custom_call.1} parent=59 // pred_check_branch
          %1039 = sbr.rel (%p1037) target = $region64
        $region63: #{tpu_custom_call.1} parent=59 // pred_region
          %s1041 = ssub.s32 256, 256
          %1042 = vsyncadd %s1033, %s1041
          %s1043 = smul.addr %s28, 2
          %s1044 = sadd.s32 %s29, %s1043
          %s1045 = smul.addr %s1044, 128
          %s1046 = scalar_lea.hbm %s10, %s1045
          %s1047 = sshll.u32 %s1036, 4
          %s1048 = int_to_ptr.vmem [resolvable:$true] %s1047
          %1053 = dma.vmem_to_hbm [thread:$0]  %s1048, 256, %s1046, %s1033, 128, 128, 8
        $region64: #{tpu_custom_call.1} parent=59 // pred_fallthru
          _
      $region60: #{tpu_custom_call.1} parent=5 // pred_fallthru
        _
      %p1054 = scmp.le.s32.totalorder 2, %s19
      // Predicated region
      $region65: #{tpu_custom_call.1} parent=5 // pred_check
        %p1055 = pneg %p1054
      $region66: #{tpu_custom_call.1} parent=5 // pred_check_branch
        %1057 = sbr.rel (%p1055) target = $region68
      $region67: #{tpu_custom_call.1} parent=5 // pred_region
        %s1058 = ssub.s32 %s19, 2
        // Predicated region
        $region69: #{tpu_custom_call.1} parent=67 // pred_check
          %p1059 = pneg %p301
        $region70: #{tpu_custom_call.1} parent=67 // pred_check_branch
          %1061 = sbr.rel (%p1059) target = $region72
        $region71: #{tpu_custom_call.1} parent=67 // pred_region
          %s1062 = sand.u32 %s286, 1
          %s1063 = scalar_lea.sflag [#allocation3], %s1062
          %s1064 = sand.u32 %s286, 1
          %s1065 = smul.addr %s1064, 16
          %s1066 = scalar_lea.vmem [#allocation2], %s1065
          %1067 = dma.done %s1063, 256
        $region72: #{tpu_custom_call.1} parent=67 // pred_fallthru
          _
      $region68: #{tpu_custom_call.1} parent=5 // pred_fallthru
        _
    $region6: #{tpu_custom_call.1} parent=1 // loop_footer
      %s23 = sadd.s32 1, %s19
    $region7: #{tpu_custom_call.1} parent=1 // loop_footer_branch
      %18 = sbr.rel target = $region3
    $region8: #{tpu_custom_call.1} parent=1 // loop_exit
      _
    %1068 = vsyncpa [#allocation3], 1
    %s1069 = scalar_lea.sflag [#allocation3], 1
    %1070 = vsyncpa %s1069, 1

// kernel: tpu_custom_call.1
$region0: #{tpu_custom_call.1}
  #allocation0 [shape = 'u32[]', space=smem, size = 0x4, offset = 0x4, fixed_abs, tag = 'smem constant byte address 0x4 - core index']
  #allocation1 [shape = 'u32[144,128]{1,0:T(1,128)}', space=vmem, size = 0x12000, scoped, tag = 'internal scratch']
  %s0 = inlined_call_operand.vmem [shape: f32[2,3,128], index: 0, kind: input, shape index: {}]
  %s1 = inlined_call_operand.vmem [shape: f32[2,8,3], index: 1, kind: input, shape index: {}]
  %s2 = inlined_call_operand.vmem [shape: f32[2,8,1], index: 2, kind: input, shape index: {}]
  %s3 = inlined_call_operand.vmem [shape: f32[2,6,128], index: 3, kind: input, shape index: {}]
  %s4 = inlined_call_operand.vmem [shape: f32[2,10,8], index: 4, kind: input, shape index: {}]
  %s5 = inlined_call_operand.vmem [shape: f32[32,6], index: 5, kind: input, shape index: {}]
  %s6 = inlined_call_operand.vmem [shape: f32[32,10], index: 6, kind: input, shape index: {}]
  %s7 = inlined_call_operand.vmem [shape: f32[32,1], index: 7, kind: input, shape index: {}]
  %s8 = inlined_call_operand.vmem [shape: f32[16,32], index: 8, kind: input, shape index: {}]
  %s9 = inlined_call_operand.vmem [shape: f32[16,1], index: 9, kind: input, shape index: {}]
  %s10 = inlined_call_operand.hbm [shape: f32[2,16,128], index: 10, kind: output, shape index: {}]
  %s11 = sld [smem:[#allocation0]]
  $region73: #{tpu_custom_call.1} parent=0
    _
  %s13 = ssub.s32 1, %s11
  %s14 = scalar_select 0, %s13, %s11
  $region1: #{tpu_custom_call.1} parent=0
    #allocation2 [shape = 'u8[16384]{0}', space=vmem, size = 0x4000, scoped, tag = 'output window, operand 0']
    #allocation3 [shape = 's32[2]{0}', space=sflag, size = 0x8, scoped, tag = 'scoped memory for tpu_custom_call.1']
    %15 = vsyncpa [#allocation3], 0
    %s16 = scalar_lea.sflag [#allocation3], 1
    %17 = vsyncpa %s16, 0
    loop: start=0, step=1, limit=4
    $region2: #{tpu_custom_call.1} parent=1 // loop_pre_header
      _
    $region3: #{tpu_custom_call.1} parent=1 // loop_header
      %s19 = sphi 0, %s23
      %p20 = scmp.ge.s32.totalorder %s19, 4
      %s26 = sphi 0, %s38
      %s27 = sphi 0, %s34
      %s28 = sphi 0, %s26
      %s29 = sphi 0, %s27
      %s30 = sphi 0, %s28
      %s31 = sphi 0, %s29
      %s43 = sphi 0, %s45
      %s46 = sphi 0, %s43
      %s47 = sphi 0, %s46
      %s63 = sphi 0, %s47
      %s69 = sphi 0, %s71
      %s72 = sphi 0, %s69
      %s73 = sphi 0, %s72
      %s89 = sphi 0, %s73
      %s95 = sphi 0, %s97
      %s98 = sphi 0, %s95
      %s99 = sphi 0, %s98
      %s115 = sphi 0, %s99
      %s123 = sphi 0, %s125
      %s126 = sphi 0, %s123
      %s127 = sphi 0, %s126
      %s143 = sphi 0, %s127
      %s149 = sphi 0, %s151
      %s152 = sphi 0, %s149
      %s153 = sphi 0, %s152
      %s169 = sphi 0, %s153
      %s173 = sphi 0, %s173
      %s175 = sphi 0, %s173
      %s176 = sphi 0, %s175
      %s190 = sphi 0, %s176
      %s194 = sphi 0, %s194
      %s196 = sphi 0, %s194
      %s197 = sphi 0, %s196
      %s211 = sphi 0, %s197
      %s215 = sphi 0, %s215
      %s217 = sphi 0, %s215
      %s218 = sphi 0, %s217
      %s232 = sphi 0, %s218
      %s236 = sphi 0, %s236
      %s238 = sphi 0, %s236
      %s239 = sphi 0, %s238
      %s253 = sphi 0, %s239
      %s257 = sphi 0, %s257
      %s259 = sphi 0, %s257
      %s260 = sphi 0, %s259
      %s274 = sphi 0, %s260
      %s282 = sphi 0, %s284
      %s285 = sphi 0, %s282
      %s286 = sphi 0, %s285
      %s302 = sphi 0, %s286
    $region4: #{tpu_custom_call.1} parent=1 // loop_header_branch
      %22 = sbr.rel (%p20) target = $region8
    $region5: #{tpu_custom_call.1} parent=1 // loop_body
      %s24 = ssub.s32 %s19, 1
      %s25 = ssub.s32 %s19, 2
      %s32 = sadd.s32 1, %s27
      %p33 = scmp.ge.s32.totalorder %s32, 1
      %s34 = scalar_select %p33, 0, %s32
      %s35 = sadd.s32 1, %s26
      %s36 = scalar_select %p33, %s35, %s26
      %p37 = scmp.ge.s32.totalorder %s36, 2
      %s38 = scalar_select %p37, 0, %s36
      %s39 = ssub.s32 %s26, %s38
      %s40 = ssub.s32 %s27, %s34
      %s41 = sor.u32 %s39, %s40
      %p42 = scmp.eq.s32.totalorder %s41, 0
      %s44 = sadd.s32 %s43, 1
      %s45 = scalar_select %p42, %s43, %s44
      %p48 = pneg %p42
      %p49 = scmp.eq.s32.totalorder %s19, 1
      %p50 = por %p48, %p49
      %p51 = scmp.ne.s32.totalorder %s43, %s46
      %p52 = scmp.eq.s32.totalorder %s19, 0
      %p53 = por %p51, %p52
      %p54 = scmp.ne.s32.totalorder %s43, %s46
      %p55 = scmp.eq.s32.totalorder %s24, 1
      %p56 = por %p54, %p55
      %p57 = scmp.ne.s32.totalorder %s46, %s47
      %p58 = scmp.eq.s32.totalorder %s24, 0
      %p59 = por %p57, %p58
      %p60 = scmp.ne.s32.totalorder %s46, %s47
      %p61 = scmp.eq.s32.totalorder %s25, 1
      %p62 = por %p60, %p61
      %p64 = scmp.ne.s32.totalorder %s47, %s63
      %p65 = scmp.eq.s32.totalorder %s25, 0
      %p66 = por %p64, %p65
      %s67 = ssub.s32 %s26, %s38
      %p68 = scmp.eq.s32.totalorder %s67, 0
      %s70 = sadd.s32 %s69, 1
      %s71 = scalar_select %p68, %s69, %s70
      %p74 = pneg %p68
      %p75 = scmp.eq.s32.totalorder %s19, 1
      %p76 = por %p74, %p75
      %p77 = scmp.ne.s32.totalorder %s69, %s72
      %p78 = scmp.eq.s32.totalorder %s19, 0
      %p79 = por %p77, %p78
      %p80 = scmp.ne.s32.totalorder %s69, %s72
      %p81 = scmp.eq.s32.totalorder %s24, 1
      %p82 = por %p80, %p81
      %p83 = scmp.ne.s32.totalorder %s72, %s73
      %p84 = scmp.eq.s32.totalorder %s24, 0
      %p85 = por %p83, %p84
      %p86 = scmp.ne.s32.totalorder %s72, %s73
      %p87 = scmp.eq.s32.totalorder %s25, 1
      %p88 = por %p86, %p87
      %p90 = scmp.ne.s32.totalorder %s73, %s89
      %p91 = scmp.eq.s32.totalorder %s25, 0
      %p92 = por %p90, %p91
      %s93 = ssub.s32 %s26, %s38
      %p94 = scmp.eq.s32.totalorder %s93, 0
      %s96 = sadd.s32 %s95, 1
      %s97 = scalar_select %p94, %s95, %s96
      %p100 = pneg %p94
      %p101 = scmp.eq.s32.totalorder %s19, 1
      %p102 = por %p100, %p101
      %p103 = scmp.ne.s32.totalorder %s95, %s98
      %p104 = scmp.eq.s32.totalorder %s19, 0
      %p105 = por %p103, %p104
      %p106 = scmp.ne.s32.totalorder %s95, %s98
      %p107 = scmp.eq.s32.totalorder %s24, 1
      %p108 = por %p106, %p107
      %p109 = scmp.ne.s32.totalorder %s98, %s99
      %p110 = scmp.eq.s32.totalorder %s24, 0
      %p111 = por %p109, %p110
      %p112 = scmp.ne.s32.totalorder %s98, %s99
      %p113 = scmp.eq.s32.totalorder %s25, 1
      %p114 = por %p112, %p113
      %p116 = scmp.ne.s32.totalorder %s99, %s115
      %p117 = scmp.eq.s32.totalorder %s25, 0
      %p118 = por %p116, %p117
      %s119 = ssub.s32 %s26, %s38
      %s120 = ssub.s32 %s27, %s34
      %s121 = sor.u32 %s119, %s120
      %p122 = scmp.eq.s32.totalorder %s121, 0
      %s124 = sadd.s32 %s123, 1
      %s125 = scalar_select %p122, %s123, %s124
      %p128 = pneg %p122
      %p129 = scmp.eq.s32.totalorder %s19, 1
      %p130 = por %p128, %p129
      %p131 = scmp.ne.s32.totalorder %s123, %s126
      %p132 = scmp.eq.s32.totalorder %s19, 0
      %p133 = por %p131, %p132
      %p134 = scmp.ne.s32.totalorder %s123, %s126
      %p135 = scmp.eq.s32.totalorder %s24, 1
      %p136 = por %p134, %p135
      %p137 = scmp.ne.s32.totalorder %s126, %s127
      %p138 = scmp.eq.s32.totalorder %s24, 0
      %p139 = por %p137, %p138
      %p140 = scmp.ne.s32.totalorder %s126, %s127
      %p141 = scmp.eq.s32.totalorder %s25, 1
      %p142 = por %p140, %p141
      %p144 = scmp.ne.s32.totalorder %s127, %s143
      %p145 = scmp.eq.s32.totalorder %s25, 0
      %p146 = por %p144, %p145
      %s147 = ssub.s32 %s26, %s38
      %p148 = scmp.eq.s32.totalorder %s147, 0
      %s150 = sadd.s32 %s149, 1
      %s151 = scalar_select %p148, %s149, %s150
      %p154 = pneg %p148
      %p155 = scmp.eq.s32.totalorder %s19, 1
      %p156 = por %p154, %p155
      %p157 = scmp.ne.s32.totalorder %s149, %s152
      %p158 = scmp.eq.s32.totalorder %s19, 0
      %p159 = por %p157, %p158
      %p160 = scmp.ne.s32.totalorder %s149, %s152
      %p161 = scmp.eq.s32.totalorder %s24, 1
      %p162 = por %p160, %p161
      %p163 = scmp.ne.s32.totalorder %s152, %s153
      %p164 = scmp.eq.s32.totalorder %s24, 0
      %p165 = por %p163, %p164
      %p166 = scmp.ne.s32.totalorder %s152, %s153
      %p167 = scmp.eq.s32.totalorder %s25, 1
      %p168 = por %p166, %p167
      %p170 = scmp.ne.s32.totalorder %s153, %s169
      %p171 = scmp.eq.s32.totalorder %s25, 0
      %p172 = por %p170, %p171
      %s174 = sadd.s32 %s173, 1
      %p177 = scmp.eq.s32.totalorder %s19, 1
      %p178 = scmp.ne.s32.totalorder %s173, %s175
      %p179 = scmp.eq.s32.totalorder %s19, 0
      %p180 = por %p178, %p179
      %p181 = scmp.ne.s32.totalorder %s173, %s175
      %p182 = scmp.eq.s32.totalorder %s24, 1
      %p183 = por %p181, %p182
      %p184 = scmp.ne.s32.totalorder %s175, %s176
      %p185 = scmp.eq.s32.totalorder %s24, 0
      %p186 = por %p184, %p185
      %p187 = scmp.ne.s32.totalorder %s175, %s176
      %p188 = scmp.eq.s32.totalorder %s25, 1
      %p189 = por %p187, %p188
      %p191 = scmp.ne.s32.totalorder %s176, %s190
      %p192 = scmp.eq.s32.totalorder %s25, 0
      %p193 = por %p191, %p192
      %s195 = sadd.s32 %s194, 1
      %p198 = scmp.eq.s32.totalorder %s19, 1
      %p199 = scmp.ne.s32.totalorder %s194, %s196
      %p200 = scmp.eq.s32.totalorder %s19, 0
      %p201 = por %p199, %p200
      %p202 = scmp.ne.s32.totalorder %s194, %s196
      %p203 = scmp.eq.s32.totalorder %s24, 1
      %p204 = por %p202, %p203
      %p205 = scmp.ne.s32.totalorder %s196, %s197
      %p206 = scmp.eq.s32.totalorder %s24, 0
      %p207 = por %p205, %p206
      %p208 = scmp.ne.s32.totalorder %s196, %s197
      %p209 = scmp.eq.s32.totalorder %s25, 1
      %p210 = por %p208, %p209
      %p212 = scmp.ne.s32.totalorder %s197, %s211
      %p213 = scmp.eq.s32.totalorder %s25, 0
      %p214 = por %p212, %p213
      %s216 = sadd.s32 %s215, 1
      %p219 = scmp.eq.s32.totalorder %s19, 1
      %p220 = scmp.ne.s32.totalorder %s215, %s217
      %p221 = scmp.eq.s32.totalorder %s19, 0
      %p222 = por %p220, %p221
      %p223 = scmp.ne.s32.totalorder %s215, %s217
      %p224 = scmp.eq.s32.totalorder %s24, 1
      %p225 = por %p223, %p224
      %p226 = scmp.ne.s32.totalorder %s217, %s218
      %p227 = scmp.eq.s32.totalorder %s24, 0
      %p228 = por %p226, %p227
      %p229 = scmp.ne.s32.totalorder %s217, %s218
      %p230 = scmp.eq.s32.totalorder %s25, 1
      %p231 = por %p229, %p230
      %p233 = scmp.ne.s32.totalorder %s218, %s232
      %p234 = scmp.eq.s32.totalorder %s25, 0
      %p235 = por %p233, %p234
      %s237 = sadd.s32 %s236, 1
      %p240 = scmp.eq.s32.totalorder %s19, 1
      %p241 = scmp.ne.s32.totalorder %s236, %s238
      %p242 = scmp.eq.s32.totalorder %s19, 0
      %p243 = por %p241, %p242
      %p244 = scmp.ne.s32.totalorder %s236, %s238
      %p245 = scmp.eq.s32.totalorder %s24, 1
      %p246 = por %p244, %p245
      %p247 = scmp.ne.s32.totalorder %s238, %s239
      %p248 = scmp.eq.s32.totalorder %s24, 0
      %p249 = por %p247, %p248
      %p250 = scmp.ne.s32.totalorder %s238, %s239
      %p251 = scmp.eq.s32.totalorder %s25, 1
      %p252 = por %p250, %p251
      %p254 = scmp.ne.s32.totalorder %s239, %s253
      %p255 = scmp.eq.s32.totalorder %s25, 0
      %p256 = por %p254, %p255
      %s258 = sadd.s32 %s257, 1
      %p261 = scmp.eq.s32.totalorder %s19, 1
      %p262 = scmp.ne.s32.totalorder %s257, %s259
      %p263 = scmp.eq.s32.totalorder %s19, 0
      %p264 = por %p262, %p263
      %p265 = scmp.ne.s32.totalorder %s257, %s259
      %p266 = scmp.eq.s32.totalorder %s24, 1
      %p267 = por %p265, %p266
      %p268 = scmp.ne.s32.totalorder %s259, %s260
      %p269 = scmp.eq.s32.totalorder %s24, 0
      %p270 = por %p268, %p269
      %p271 = scmp.ne.s32.totalorder %s259, %s260
      %p272 = scmp.eq.s32.totalorder %s25, 1
      %p273 = por %p271, %p272
      %p275 = scmp.ne.s32.totalorder %s260, %s274
      %p276 = scmp.eq.s32.totalorder %s25, 0
      %p277 = por %p275, %p276
      %s278 = ssub.s32 %s26, %s38
      %s279 = ssub.s32 %s27, %s34
      %s280 = sor.u32 %s278, %s279
      %p281 = scmp.eq.s32.totalorder %s280, 0
      %s283 = sadd.s32 %s282, 1
      %s284 = scalar_select %p281, %s282, %s283
      %p287 = pneg %p281
      %p288 = scmp.eq.s32.totalorder %s19, 1
      %p289 = por %p287, %p288
      %p290 = scmp.ne.s32.totalorder %s282, %s285
      %p291 = scmp.eq.s32.totalorder %s19, 0
      %p292 = por %p290, %p291
      %p293 = scmp.ne.s32.totalorder %s282, %s285
      %p294 = scmp.eq.s32.totalorder %s24, 1
      %p295 = por %p293, %p294
      %p296 = scmp.ne.s32.totalorder %s285, %s286
      %p297 = scmp.eq.s32.totalorder %s24, 0
      %p298 = por %p296, %p297
      %p299 = scmp.ne.s32.totalorder %s285, %s286
      %p300 = scmp.eq.s32.totalorder %s25, 1
      %p301 = por %p299, %p300
      %p303 = scmp.ne.s32.totalorder %s286, %s302
      %p304 = scmp.eq.s32.totalorder %s25, 0
      %p305 = por %p303, %p304
      %p306 = scmp.le.s32.totalorder 1, %s19
      %p307 = scmp.lt.s32.totalorder %s19, 3
      %p308 = pnand %p306, %p307
      %p309 = pneg %p308
      // Predicated region
      $region9: #{tpu_custom_call.1} parent=5 // pred_check
        _
      $region10: #{tpu_custom_call.1} parent=5 // pred_check_branch
        %311 = sbr.rel (%p308) target = $region12
      $region11: #{tpu_custom_call.1} parent=5 // pred_region
        %s312 = ssub.s32 %s19, 1
        // Predicated region
        $region13: #{tpu_custom_call.1} parent=11 // pred_check
          %p313 = pneg %p186
        $region14: #{tpu_custom_call.1} parent=11 // pred_check_branch
          %315 = sbr.rel (%p313) target = $region16
        $region15: #{tpu_custom_call.1} parent=11 // pred_region
          _
        $region16: #{tpu_custom_call.1} parent=11 // pred_fallthru
          _
        // Predicated region
        $region17: #{tpu_custom_call.1} parent=11 // pred_check
          %p316 = pneg %p207
        $region18: #{tpu_custom_call.1} parent=11 // pred_check_branch
          %318 = sbr.rel (%p316) target = $region20
        $region19: #{tpu_custom_call.1} parent=11 // pred_region
          _
        $region20: #{tpu_custom_call.1} parent=11 // pred_fallthru
          _
        // Predicated region
        $region21: #{tpu_custom_call.1} parent=11 // pred_check
          %p319 = pneg %p228
        $region22: #{tpu_custom_call.1} parent=11 // pred_check_branch
          %321 = sbr.rel (%p319) target = $region24
        $region23: #{tpu_custom_call.1} parent=11 // pred_region
          _
        $region24: #{tpu_custom_call.1} parent=11 // pred_fallthru
          _
        // Predicated region
        $region25: #{tpu_custom_call.1} parent=11 // pred_check
          %p322 = pneg %p249
        $region26: #{tpu_custom_call.1} parent=11 // pred_check_branch
          %324 = sbr.rel (%p322) target = $region28
        $region27: #{tpu_custom_call.1} parent=11 // pred_region
          _
        $region28: #{tpu_custom_call.1} parent=11 // pred_fallthru
          _
        // Predicated region
        $region29: #{tpu_custom_call.1} parent=11 // pred_check
          %p325 = pneg %p270
        $region30: #{tpu_custom_call.1} parent=11 // pred_check_branch
          %327 = sbr.rel (%p325) target = $region32
        $region31: #{tpu_custom_call.1} parent=11 // pred_region
          _
        $region32: #{tpu_custom_call.1} parent=11 // pred_fallthru
          _
      $region12: #{tpu_custom_call.1} parent=5 // pred_fallthru
        _
      %p328 = scmp.lt.s32.totalorder %s19, 2
      // Predicated region
      $region33: #{tpu_custom_call.1} parent=5 // pred_check
        %p329 = pneg %p328
      $region34: #{tpu_custom_call.1} parent=5 // pred_check_branch
        %331 = sbr.rel (%p329) target = $region36
      $region35: #{tpu_custom_call.1} parent=5 // pred_region
        // Predicated region
        $region37: #{tpu_custom_call.1} parent=35 // pred_check
          %p332 = pneg %p53
        $region38: #{tpu_custom_call.1} parent=35 // pred_check_branch
          %334 = sbr.rel (%p332) target = $region40
        $region39: #{tpu_custom_call.1} parent=35 // pred_region
          %p335 = scmp.lt.s32.totalorder %s26, 1
          %s336 = scalar_select %p335, %s26, 1
          %p337 = scmp.lt.s32.totalorder %s27, 0
          %s338 = scalar_select %p337, %s27, 0
          %s339 = sadd.s32 %s338, %s336
          %s340 = smul.addr %s339, 4
          %s341 = scalar_lea.vmem %s0, %s340
        $region40: #{tpu_custom_call.1} parent=35 // pred_fallthru
          _
        // Predicated region
        $region41: #{tpu_custom_call.1} parent=35 // pred_check
          %p342 = pneg %p79
        $region42: #{tpu_custom_call.1} parent=35 // pred_check_branch
          %344 = sbr.rel (%p342) target = $region44
        $region43: #{tpu_custom_call.1} parent=35 // pred_region
          %p345 = scmp.lt.s32.totalorder %s26, 1
          %s346 = scalar_select %p345, %s26, 1
          %s347 = smul.addr %s346, 8
          %s348 = scalar_lea.vmem %s1, %s347
        $region44: #{tpu_custom_call.1} parent=35 // pred_fallthru
          _
        // Predicated region
        $region45: #{tpu_custom_call.1} parent=35 // pred_check
          %p349 = pneg %p105
        $region46: #{tpu_custom_call.1} parent=35 // pred_check_branch
          %351 = sbr.rel (%p349) target = $region48
        $region47: #{tpu_custom_call.1} parent=35 // pred_region
          %p352 = scmp.lt.s32.totalorder %s26, 1
          %s353 = scalar_select %p352, %s26, 1
          %s354 = smul.addr %s353, 8
          %s355 = scalar_lea.vmem %s2, %s354
        $region48: #{tpu_custom_call.1} parent=35 // pred_fallthru
          _
        // Predicated region
        $region49: #{tpu_custom_call.1} parent=35 // pred_check
          %p356 = pneg %p133
        $region50: #{tpu_custom_call.1} parent=35 // pred_check_branch
          %358 = sbr.rel (%p356) target = $region52
        $region51: #{tpu_custom_call.1} parent=35 // pred_region
          %p359 = scmp.lt.s32.totalorder %s26, 1
          %s360 = scalar_select %p359, %s26, 1
          %p361 = scmp.lt.s32.totalorder %s27, 0
          %s362 = scalar_select %p361, %s27, 0
          %s363 = sadd.s32 %s362, %s360
          %s364 = smul.addr %s363, 8
          %s365 = scalar_lea.vmem %s3, %s364
        $region52: #{tpu_custom_call.1} parent=35 // pred_fallthru
          _
        // Predicated region
        $region53: #{tpu_custom_call.1} parent=35 // pred_check
          %p366 = pneg %p159
        $region54: #{tpu_custom_call.1} parent=35 // pred_check_branch
          %368 = sbr.rel (%p366) target = $region56
        $region55: #{tpu_custom_call.1} parent=35 // pred_region
          %p369 = scmp.lt.s32.totalorder %s26, 1
          %s370 = scalar_select %p369, %s26, 1
          %s371 = smul.addr %s370, 2
          %s372 = smul.addr %s371, 8
          %s373 = scalar_lea.vmem %s4, %s372
        $region56: #{tpu_custom_call.1} parent=35 // pred_fallthru
          _
      $region36: #{tpu_custom_call.1} parent=5 // pred_fallthru
        _
      %p374 = scmp.le.s32.totalorder 1, %s19
      %p375 = scmp.lt.s32.totalorder %s19, 3
      %p376 = pnand %p374, %p375
      %p377 = pneg %p376
      // Predicated region
      $region57: #{tpu_custom_call.1} parent=5 // pred_check
        _
      $region58: #{tpu_custom_call.1} parent=5 // pred_check_branch
        %379 = sbr.rel (%p376) target = $region60
      $region59: #{tpu_custom_call.1} parent=5 // pred_region
        %s380 = ssub.s32 %s19, 1
        %p381 = scmp.lt.s32.totalorder %s28, 1
        %s382 = scalar_select %p381, %s28, 1
        %p383 = scmp.lt.s32.totalorder %s29, 0
        %s384 = scalar_select %p383, %s29, 0
        %s385 = sadd.s32 %s384, %s382
        %s386 = smul.addr %s385, 4
        %s387 = scalar_lea.vmem %s0, %s386
        %p388 = pneg %p59
        %p389 = pneg %p56
        %p390 = scmp.lt.s32.totalorder %s28, 1
        %s391 = scalar_select %p390, %s28, 1
        %s392 = smul.addr %s391, 8
        %s393 = scalar_lea.vmem %s1, %s392
        %p394 = pneg %p85
        %p395 = pneg %p82
        %p396 = scmp.lt.s32.totalorder %s28, 1
        %s397 = scalar_select %p396, %s28, 1
        %s398 = smul.addr %s397, 8
        %s399 = scalar_lea.vmem %s2, %s398
        %p400 = pneg %p111
        %p401 = pneg %p108
        %p402 = scmp.lt.s32.totalorder %s28, 1
        %s403 = scalar_select %p402, %s28, 1
        %p404 = scmp.lt.s32.totalorder %s29, 0
        %s405 = scalar_select %p404, %s29, 0
        %s406 = sadd.s32 %s405, %s403
        %s407 = smul.addr %s406, 8
        %s408 = scalar_lea.vmem %s3, %s407
        %p409 = pneg %p139
        %p410 = pneg %p136
        %p411 = scmp.lt.s32.totalorder %s28, 1
        %s412 = scalar_select %p411, %s28, 1
        %s413 = smul.addr %s412, 2
        %s414 = smul.addr %s413, 8
        %s415 = scalar_lea.vmem %s4, %s414
        %p416 = pneg %p165
        %p417 = pneg %p162
        %p418 = pneg %p186
        %p419 = pneg %p183
        %p420 = pneg %p207
        %p421 = pneg %p204
        %p422 = pneg %p228
        %p423 = pneg %p225
        %p424 = pneg %p249
        %p425 = pneg %p246
        %p426 = pneg %p270
        %p427 = pneg %p267
        %p428 = pneg %p298
        %p429 = pneg %p295
        %s430 = sand.u32 %s285, 1
        %s431 = scalar_lea.sflag [#allocation3], %s430
        %s432 = sand.u32 %s285, 1
        %s433 = smul.addr %s432, 16
        %s434 = scalar_lea.vmem [#allocation2], %s433
        %p435 = scmp.lt.s32.totalorder %s28, 1
        %s436 = scalar_select %p435, %s28, 1
        %p437 = scmp.lt.s32.totalorder %s29, 0
        %s438 = scalar_select %p437, %s29, 0
        %s439 = sadd.s32 %s438, %s436
        %s440 = smul.addr %s439, 4
        %s441 = scalar_lea.vmem %s0, %s440
        %p442 = scmp.lt.s32.totalorder %s28, 1
        %s443 = scalar_select %p442, %s28, 1
        %s444 = smul.addr %s443, 8
        %s445 = scalar_lea.vmem %s1, %s444
        %p446 = scmp.lt.s32.totalorder %s28, 1
        %s447 = scalar_select %p446, %s28, 1
        %s448 = smul.addr %s447, 8
        %s449 = scalar_lea.vmem %s2, %s448
        %p450 = scmp.lt.s32.totalorder %s28, 1
        %s451 = scalar_select %p450, %s28, 1
        %p452 = scmp.lt.s32.totalorder %s29, 0
        %s453 = scalar_select %p452, %s29, 0
        %s454 = sadd.s32 %s453, %s451
        %s455 = smul.addr %s454, 8
        %s456 = scalar_lea.vmem %s3, %s455
        %p457 = scmp.lt.s32.totalorder %s28, 1
        %s458 = scalar_select %p457, %s28, 1
        %s459 = smul.addr %s458, 2
        %s460 = smul.addr %s459, 8
        %s461 = scalar_lea.vmem %s4, %s460
        %v462 = vld [vmem:[%s441] sm:$0x7]
        %v463 = vld [vmem:[%s445] sm:$0xff]
        %v464 = vld [vmem:[%s449] sm:$0xff]
        %v465 = vld [vmem:[%s456] sm:$0x3f]
        %v466 = vld [vmem:[%s461] sm:$0xff]
        %v467 = vld [vmem:[%s461 + $0x8] sm:$0x3]
        %vm468 = vcmask 23552
        %v470 = vsel %vm468, %v463, 0
        %vm472 = vcmask 1042432
        %v474 = vsel %vm472, %v462, 0
        %476 = vmatprep.subr.mxu0 0.0
        %477 = vmatpush1.msra.mxu0 0.0
        %478 = vmatprep.subr.mxu0 0.0
        %479 = vmatpush1.msra.mxu0 0.0
        %480 = vmatprep.subr.mxu0 0.0
        %481 = vmatpush1.msra.mxu0 0.0
        %482 = vmatprep.subr.mxu0 0.0
        %483 = vmatpush1.msra.mxu0 0.0
        %484 = vmatprep.subr.mxu0 0.0
        %485 = vmatpush1.msra.mxu0 0.0
        %486 = vmatprep.subr.mxu0 0.0
        %487 = vmatpush1.msra.mxu0 0.0
        %488 = vmatprep.subr.mxu0 0.0
        %489 = vmatpush1.msra.mxu0 0.0
        %490 = vmatprep.subr.mxu0 0.0
        %491 = vmatpush1.msra.mxu0 0.0
        %492 = vmatprep.subr.mxu0 0.0
        %493 = vmatpush1.msra.mxu0 0.0
        %494 = vmatprep.subr.mxu0 0.0
        %495 = vmatpush1.msra.mxu0 0.0
        %496 = vmatprep.subr.mxu0 0.0
        %497 = vmatpush1.msra.mxu0 0.0
        %498 = vmatprep.subr.mxu0 0.0
        %499 = vmatpush1.msra.mxu0 0.0
        %500 = vmatprep.subr.mxu0 0.0
        %501 = vmatpush1.msra.mxu0 0.0
        %502 = vmatprep.subr.mxu0 0.0
        %503 = vmatpush1.msra.mxu0 0.0
        %504 = vmatprep.subr.mxu0 0.0
        %505 = vmatpush1.msra.mxu0 0.0
        %506 = vmatprep.subr.mxu0 0.0
        %507 = vmatpush1.msra.mxu0 %v474
        %508 = vmatprep.subr.mxu0 0.0
        %509 = vmatpush2.msra.mxu0 0.0
        %510 = vmatprep.subr.mxu0 0.0
        %511 = vmatpush2.msra.mxu0 0.0
        %512 = vmatprep.subr.mxu0 0.0
        %513 = vmatpush2.msra.mxu0 0.0
        %514 = vmatprep.subr.mxu0 0.0
        %515 = vmatpush2.msra.mxu0 0.0
        %516 = vmatprep.subr.mxu0 0.0
        %517 = vmatpush2.msra.mxu0 0.0
        %518 = vmatprep.subr.mxu0 0.0
        %519 = vmatpush2.msra.mxu0 0.0
        %520 = vmatprep.subr.mxu0 0.0
        %521 = vmatpush2.msra.mxu0 0.0
        %522 = vmatprep.subr.mxu0 0.0
        %523 = vmatpush2.msra.mxu0 0.0
        %524 = vmatprep.subr.mxu0 0.0
        %525 = vmatpush2.msra.mxu0 0.0
        %526 = vmatprep.subr.mxu0 0.0
        %527 = vmatpush2.msra.mxu0 0.0
        %528 = vmatprep.subr.mxu0 0.0
        %529 = vmatpush2.msra.mxu0 0.0
        %530 = vmatprep.subr.mxu0 0.0
        %531 = vmatpush2.msra.mxu0 0.0
        %532 = vmatprep.subr.mxu0 0.0
        %533 = vmatpush2.msra.mxu0 0.0
        %534 = vmatprep.subr.mxu0 0.0
        %535 = vmatpush2.msra.mxu0 0.0
        %536 = vmatprep.subr.mxu0 0.0
        %537 = vmatpush2.msra.mxu0 0.0
        %538 = vmatprep.subr.mxu0 0.0
        %539 = vmatpush2.msra.mxu0 0.0
        %540 = vmatprep.mubr.f32.mxu0 0.0
        %541 = vmatmul.mubr.f32.gmra.mxu0 %v470
        %v542 = vpop.f32.mrf.mxu0
        %v543 = vadd.f32 0.0, %v542
        %v544 = vpop.f32.mrf.mxu0
        %545 = vdwg.mxu0
        %v546 = vmul.f32 %v543, -2.0
        %548 = vset.pattern.permute.xlu0 0
        %549 = vperm.xlu0 %548, %v464
        %v550 = vpop.permute.xlu0 %549
        %v552 = vadd.f32 %v546, %v550
        %v553 = vmul.f32 %v462, %v462
        %v554 = vsel %vm472, %v553, 0.0
        %v555 = vrot.slane %v554, 4
        %v556 = vadd.f32 %v554, %v555
        %v557 = vrot.slane %v556, 2
        %v558 = vadd.f32 %v556, %v557
        %v559 = vrot.slane %v558, 1
        %v560 = vadd.f32 %v558, %v559
        %v561 = vadd.f32 %v552, %v560
        %v562 = vrot.slane %v561, 4
        %v563 = vmin.f32 %v561, %v562
        %v564 = vrot.slane %v563, 2
        %v565 = vmin.f32 %v563, %v564
        %v566 = vrot.slane %v565, 1
        %v567 = vmin.f32 %v565, %v566
        %vm568 = vcmp.eq.f32.partialorder %v561, %v567
        %v569 = vadd.f32 %v567, 1e-08
        %v570 = vrcp.pop %v569
        %v571 = vmul.f32 1.0, %v570
        %v572 = vsel %vm568, %v571, 0.0
        %v573 = vadd.f32 %v572, 0.0
        %v574 = vadd.f32 %v571, 0.0
        %v575 = vsel %vm568, inf, %v561
        %v576 = vrot.slane %v575, 4
        %v577 = vmin.f32 %v575, %v576
        %v578 = vrot.slane %v577, 2
        %v579 = vmin.f32 %v577, %v578
        %v580 = vrot.slane %v579, 1
        %v581 = vmin.f32 %v579, %v580
        %vm582 = vcmp.eq.f32.partialorder %v575, %v581
        %v583 = vadd.f32 %v581, 1e-08
        %v584 = vrcp.pop %v583
        %v585 = vmul.f32 1.0, %v584
        %v586 = vsel %vm582, %v585, 0.0
        %v587 = vadd.f32 %v573, %v586
        %v588 = vadd.f32 %v574, %v585
        %v589 = vsel %vm582, inf, %v575
        %v590 = vrot.slane %v589, 4
        %v591 = vmin.f32 %v589, %v590
        %v592 = vrot.slane %v591, 2
        %v593 = vmin.f32 %v591, %v592
        %v594 = vrot.slane %v593, 1
        %v595 = vmin.f32 %v593, %v594
        %vm596 = vcmp.eq.f32.partialorder %v589, %v595
        %v597 = vadd.f32 %v595, 1e-08
        %v598 = vrcp.pop %v597
        %v599 = vmul.f32 1.0, %v598
        %v600 = vsel %vm596, %v599, 0.0
        %v601 = vadd.f32 %v587, %v600
        %v602 = vadd.f32 %v588, %v599
        %vm603 = vcmask 64512
        %v605 = vsel %vm603, %v466, 0
        %v608 = vsel %vm603, %v467, 0
        %610 = vmatprep.subr.mxu0 0.0
        %611 = vmatpush1.msra.mxu0 0.0
        %612 = vmatprep.subr.mxu0 0.0
        %613 = vmatpush1.msra.mxu0 0.0
        %614 = vmatprep.subr.mxu0 0.0
        %615 = vmatpush1.msra.mxu0 0.0
        %616 = vmatprep.subr.mxu0 0.0
        %617 = vmatpush1.msra.mxu0 0.0
        %618 = vmatprep.subr.mxu0 0.0
        %619 = vmatpush1.msra.mxu0 0.0
        %620 = vmatprep.subr.mxu0 0.0
        %621 = vmatpush1.msra.mxu0 0.0
        %622 = vmatprep.subr.mxu0 0.0
        %623 = vmatpush1.msra.mxu0 0.0
        %624 = vmatprep.subr.mxu0 0.0
        %625 = vmatpush1.msra.mxu0 0.0
        %626 = vmatprep.subr.mxu0 0.0
        %627 = vmatpush1.msra.mxu0 0.0
        %628 = vmatprep.subr.mxu0 0.0
        %629 = vmatpush1.msra.mxu0 0.0
        %630 = vmatprep.subr.mxu0 0.0
        %631 = vmatpush1.msra.mxu0 0.0
        %632 = vmatprep.subr.mxu0 0.0
        %633 = vmatpush1.msra.mxu0 0.0
        %634 = vmatprep.subr.mxu0 0.0
        %635 = vmatpush1.msra.mxu0 0.0
        %636 = vmatprep.subr.mxu0 0.0
        %637 = vmatpush1.msra.mxu0 0.0
        %638 = vmatprep.subr.mxu0 0.0
        %639 = vmatpush1.msra.mxu0 0.0
        %640 = vmatprep.subr.mxu0 0.0
        %641 = vmatpush1.msra.mxu0 %v601
        %642 = vmatprep.subr.mxu0 0.0
        %643 = vmatpush2.msra.mxu0 0.0
        %644 = vmatprep.subr.mxu0 0.0
        %645 = vmatpush2.msra.mxu0 0.0
        %646 = vmatprep.subr.mxu0 0.0
        %647 = vmatpush2.msra.mxu0 0.0
        %648 = vmatprep.subr.mxu0 0.0
        %649 = vmatpush2.msra.mxu0 0.0
        %650 = vmatprep.subr.mxu0 0.0
        %651 = vmatpush2.msra.mxu0 0.0
        %652 = vmatprep.subr.mxu0 0.0
        %653 = vmatpush2.msra.mxu0 0.0
        %654 = vmatprep.subr.mxu0 0.0
        %655 = vmatpush2.msra.mxu0 0.0
        %656 = vmatprep.subr.mxu0 0.0
        %657 = vmatpush2.msra.mxu0 0.0
        %658 = vmatprep.subr.mxu0 0.0
        %659 = vmatpush2.msra.mxu0 0.0
        %660 = vmatprep.subr.mxu0 0.0
        %661 = vmatpush2.msra.mxu0 0.0
        %662 = vmatprep.subr.mxu0 0.0
        %663 = vmatpush2.msra.mxu0 0.0
        %664 = vmatprep.subr.mxu0 0.0
        %665 = vmatpush2.msra.mxu0 0.0
        %666 = vmatprep.subr.mxu0 0.0
        %667 = vmatpush2.msra.mxu0 0.0
        %668 = vmatprep.subr.mxu0 0.0
        %669 = vmatpush2.msra.mxu0 0.0
        %670 = vmatprep.subr.mxu0 0.0
        %671 = vmatpush2.msra.mxu0 0.0
        %672 = vmatprep.subr.mxu0 0.0
        %673 = vmatpush2.msra.mxu0 0.0
        %674 = vmatprep.mubr.f32.mxu0 0.0
        %675 = vmatmul.mubr.f32.gmra.mxu0 %v605
        %v676 = vpop.f32.mrf.mxu0
        %v677 = vadd.f32 0.0, %v676
        %v678 = vpop.f32.mrf.mxu0
        %679 = vmatprep.mubr.f32.mxu0 0.0
        %680 = vmatmul.mubr.f32.gmra.mxu0 %v608
        %v681 = vpop.f32.mrf.mxu0
        %v682 = vadd.f32 0.0, %v681
        %v683 = vpop.f32.mrf.mxu0
        %684 = vdwg.mxu0
        %v685 = vrcp.pop %v602
        %v686 = vmul.f32 %v677, %v685
        %v687 = vmul.f32 %v682, %v685
        %v688 = vld [vmem:[%s5] sm:$0xff]
        %v689 = vld [vmem:[%s5 + $0x8] sm:$0xff]
        %v690 = vld [vmem:[%s5 + $0x10] sm:$0xff]
        %v691 = vld [vmem:[%s5 + $0x18] sm:$0xff]
        %v692 = vld [vmem:[%s6] sm:$0xff]
        %v693 = vld [vmem:[%s6 + $0x8] sm:$0xff]
        %v694 = vld [vmem:[%s6 + $0x10] sm:$0xff]
        %v695 = vld [vmem:[%s6 + $0x18] sm:$0xff]
        %vm696 = vcmask 80896
        %v698 = vsel %vm696, %v692, 0
        %v701 = vsel %vm696, %v693, 0
        %v704 = vsel %vm696, %v694, 0
        %v707 = vsel %vm696, %v695, 0
        %vm709 = vcmask 1041408
        %v711 = vsel %vm709, %v687, 0
        %713 = vmatprep.subr.mxu0 0.0
        %714 = vmatpush1.msra.mxu0 0.0
        %715 = vmatprep.subr.mxu0 0.0
        %716 = vmatpush1.msra.mxu0 0.0
        %717 = vmatprep.subr.mxu0 0.0
        %718 = vmatpush1.msra.mxu0 0.0
        %719 = vmatprep.subr.mxu0 0.0
        %720 = vmatpush1.msra.mxu0 0.0
        %721 = vmatprep.subr.mxu0 0.0
        %722 = vmatpush1.msra.mxu0 0.0
        %723 = vmatprep.subr.mxu0 0.0
        %724 = vmatpush1.msra.mxu0 0.0
        %725 = vmatprep.subr.mxu0 0.0
        %726 = vmatpush1.msra.mxu0 0.0
        %727 = vmatprep.subr.mxu0 0.0
        %728 = vmatpush1.msra.mxu0 0.0
        %729 = vmatprep.subr.mxu0 0.0
        %730 = vmatpush1.msra.mxu0 0.0
        %731 = vmatprep.subr.mxu0 0.0
        %732 = vmatpush1.msra.mxu0 0.0
        %733 = vmatprep.subr.mxu0 0.0
        %734 = vmatpush1.msra.mxu0 0.0
        %735 = vmatprep.subr.mxu0 0.0
        %736 = vmatpush1.msra.mxu0 0.0
        %737 = vmatprep.subr.mxu0 0.0
        %738 = vmatpush1.msra.mxu0 0.0
        %739 = vmatprep.subr.mxu0 0.0
        %740 = vmatpush1.msra.mxu0 0.0
        %741 = vmatprep.subr.mxu0 0.0
        %742 = vmatpush1.msra.mxu0 %v711
        %743 = vmatprep.subr.mxu0 0.0
        %744 = vmatpush1.msra.mxu0 %v686
        %745 = vmatprep.subr.mxu0 0.0
        %746 = vmatpush2.msra.mxu0 0.0
        %747 = vmatprep.subr.mxu0 0.0
        %748 = vmatpush2.msra.mxu0 0.0
        %749 = vmatprep.subr.mxu0 0.0
        %750 = vmatpush2.msra.mxu0 0.0
        %751 = vmatprep.subr.mxu0 0.0
        %752 = vmatpush2.msra.mxu0 0.0
        %753 = vmatprep.subr.mxu0 0.0
        %754 = vmatpush2.msra.mxu0 0.0
        %755 = vmatprep.subr.mxu0 0.0
        %756 = vmatpush2.msra.mxu0 0.0
        %757 = vmatprep.subr.mxu0 0.0
        %758 = vmatpush2.msra.mxu0 0.0
        %759 = vmatprep.subr.mxu0 0.0
        %760 = vmatpush2.msra.mxu0 0.0
        %761 = vmatprep.subr.mxu0 0.0
        %762 = vmatpush2.msra.mxu0 0.0
        %763 = vmatprep.subr.mxu0 0.0
        %764 = vmatpush2.msra.mxu0 0.0
        %765 = vmatprep.subr.mxu0 0.0
        %766 = vmatpush2.msra.mxu0 0.0
        %767 = vmatprep.subr.mxu0 0.0
        %768 = vmatpush2.msra.mxu0 0.0
        %769 = vmatprep.subr.mxu0 0.0
        %770 = vmatpush2.msra.mxu0 0.0
        %771 = vmatprep.subr.mxu0 0.0
        %772 = vmatpush2.msra.mxu0 0.0
        %773 = vmatprep.subr.mxu0 0.0
        %774 = vmatpush2.msra.mxu0 0.0
        %775 = vmatprep.subr.mxu0 0.0
        %776 = vmatpush2.msra.mxu0 0.0
        %777 = vmatprep.mubr.f32.mxu0 0.0
        %778 = vmatmul.mubr.f32.gmra.mxu0 %v698
        %v779 = vpop.f32.mrf.mxu0
        %v780 = vadd.f32 0.0, %v779
        %v781 = vpop.f32.mrf.mxu0
        %782 = vmatprep.mubr.f32.mxu0 0.0
        %783 = vmatmul.mubr.f32.gmra.mxu0 %v701
        %v784 = vpop.f32.mrf.mxu0
        %v785 = vadd.f32 0.0, %v784
        %v786 = vpop.f32.mrf.mxu0
        %787 = vmatprep.mubr.f32.mxu0 0.0
        %788 = vmatmul.mubr.f32.gmra.mxu0 %v704
        %v789 = vpop.f32.mrf.mxu0
        %v790 = vadd.f32 0.0, %v789
        %v791 = vpop.f32.mrf.mxu0
        %792 = vmatprep.mubr.f32.mxu0 0.0
        %793 = vmatmul.mubr.f32.gmra.mxu0 %v707
        %v794 = vpop.f32.mrf.mxu0
        %v795 = vadd.f32 0.0, %v794
        %v796 = vpop.f32.mrf.mxu0
        %797 = vdwg.mxu0
        %vm798 = vcmask 48128
        %v800 = vsel %vm798, %v688, 0
        %v803 = vsel %vm798, %v689, 0
        %v806 = vsel %vm798, %v690, 0
        %v809 = vsel %vm798, %v691, 0
        %vm811 = vcmask 1045504
        %v813 = vsel %vm811, %v465, 0
        %815 = vmatprep.subr.mxu0 0.0
        %816 = vmatpush1.msra.mxu0 0.0
        %817 = vmatprep.subr.mxu0 0.0
        %818 = vmatpush1.msra.mxu0 0.0
        %819 = vmatprep.subr.mxu0 0.0
        %820 = vmatpush1.msra.mxu0 0.0
        %821 = vmatprep.subr.mxu0 0.0
        %822 = vmatpush1.msra.mxu0 0.0
        %823 = vmatprep.subr.mxu0 0.0
        %824 = vmatpush1.msra.mxu0 0.0
        %825 = vmatprep.subr.mxu0 0.0
        %826 = vmatpush1.msra.mxu0 0.0
        %827 = vmatprep.subr.mxu0 0.0
        %828 = vmatpush1.msra.mxu0 0.0
        %829 = vmatprep.subr.mxu0 0.0
        %830 = vmatpush1.msra.mxu0 0.0
        %831 = vmatprep.subr.mxu0 0.0
        %832 = vmatpush1.msra.mxu0 0.0
        %833 = vmatprep.subr.mxu0 0.0
        %834 = vmatpush1.msra.mxu0 0.0
        %835 = vmatprep.subr.mxu0 0.0
        %836 = vmatpush1.msra.mxu0 0.0
        %837 = vmatprep.subr.mxu0 0.0
        %838 = vmatpush1.msra.mxu0 0.0
        %839 = vmatprep.subr.mxu0 0.0
        %840 = vmatpush1.msra.mxu0 0.0
        %841 = vmatprep.subr.mxu0 0.0
        %842 = vmatpush1.msra.mxu0 0.0
        %843 = vmatprep.subr.mxu0 0.0
        %844 = vmatpush1.msra.mxu0 0.0
        %845 = vmatprep.subr.mxu0 0.0
        %846 = vmatpush1.msra.mxu0 %v813
        %847 = vmatprep.subr.mxu0 0.0
        %848 = vmatpush2.msra.mxu0 0.0
        %849 = vmatprep.subr.mxu0 0.0
        %850 = vmatpush2.msra.mxu0 0.0
        %851 = vmatprep.subr.mxu0 0.0
        %852 = vmatpush2.msra.mxu0 0.0
        %853 = vmatprep.subr.mxu0 0.0
        %854 = vmatpush2.msra.mxu0 0.0
        %855 = vmatprep.subr.mxu0 0.0
        %856 = vmatpush2.msra.mxu0 0.0
        %857 = vmatprep.subr.mxu0 0.0
        %858 = vmatpush2.msra.mxu0 0.0
        %859 = vmatprep.subr.mxu0 0.0
        %860 = vmatpush2.msra.mxu0 0.0
        %861 = vmatprep.subr.mxu0 0.0
        %862 = vmatpush2.msra.mxu0 0.0
        %863 = vmatprep.subr.mxu0 0.0
        %864 = vmatpush2.msra.mxu0 0.0
        %865 = vmatprep.subr.mxu0 0.0
        %866 = vmatpush2.msra.mxu0 0.0
        %867 = vmatprep.subr.mxu0 0.0
        %868 = vmatpush2.msra.mxu0 0.0
        %869 = vmatprep.subr.mxu0 0.0
        %870 = vmatpush2.msra.mxu0 0.0
        %871 = vmatprep.subr.mxu0 0.0
        %872 = vmatpush2.msra.mxu0 0.0
        %873 = vmatprep.subr.mxu0 0.0
        %874 = vmatpush2.msra.mxu0 0.0
        %875 = vmatprep.subr.mxu0 0.0
        %876 = vmatpush2.msra.mxu0 0.0
        %877 = vmatprep.subr.mxu0 0.0
        %878 = vmatpush2.msra.mxu0 0.0
        %879 = vmatprep.mubr.f32.mxu0 0.0
        %880 = vmatmul.mubr.f32.gmra.mxu0 %v800
        %v881 = vpop.f32.mrf.mxu0
        %v882 = vadd.f32 %v780, %v881
        %v883 = vpop.f32.mrf.mxu0
        %884 = vmatprep.mubr.f32.mxu0 0.0
        %885 = vmatmul.mubr.f32.gmra.mxu0 %v803
        %v886 = vpop.f32.mrf.mxu0
        %v887 = vadd.f32 %v785, %v886
        %v888 = vpop.f32.mrf.mxu0
        %889 = vmatprep.mubr.f32.mxu0 0.0
        %890 = vmatmul.mubr.f32.gmra.mxu0 %v806
        %v891 = vpop.f32.mrf.mxu0
        %v892 = vadd.f32 %v790, %v891
        %v893 = vpop.f32.mrf.mxu0
        %894 = vmatprep.mubr.f32.mxu0 0.0
        %895 = vmatmul.mubr.f32.gmra.mxu0 %v809
        %v896 = vpop.f32.mrf.mxu0
        %v897 = vadd.f32 %v795, %v896
        %v898 = vpop.f32.mrf.mxu0
        %899 = vdwg.mxu0
        %v900 = vld [vmem:[%s7] sm:$0xff]
        %v901 = vld [vmem:[%s7 + $0x8] sm:$0xff]
        %v902 = vld [vmem:[%s7 + $0x10] sm:$0xff]
        %v903 = vld [vmem:[%s7 + $0x18] sm:$0xff]
        %905 = vset.pattern.permute.xlu0 0
        %906 = vperm.xlu0 %905, %v900
        %v907 = vpop.permute.xlu0 %906
        %910 = vset.pattern.permute.xlu0 0
        %911 = vperm.xlu0 %910, %v901
        %v912 = vpop.permute.xlu0 %911
        %915 = vset.pattern.permute.xlu0 0
        %916 = vperm.xlu0 %915, %v902
        %v917 = vpop.permute.xlu0 %916
        %920 = vset.pattern.permute.xlu0 0
        %921 = vperm.xlu0 %920, %v903
        %v922 = vpop.permute.xlu0 %921
        %v924 = vadd.f32 %v882, %v907
        %v925 = vadd.f32 %v887, %v912
        %v926 = vadd.f32 %v892, %v917
        %v927 = vadd.f32 %v897, %v922
        %v928 = vmax.f32 %v924, 0.0
        %v929 = vmax.f32 %v925, 0.0
        %v930 = vmax.f32 %v926, 0.0
        %v931 = vmax.f32 %v927, 0.0
        %v932 = vld [vmem:[%s8] sm:$0xff]
        %v933 = vld [vmem:[%s8 + $0x8] sm:$0xff]
        %v934 = vld [vmem:[%s9] sm:$0xff]
        %v935 = vld [vmem:[%s9 + $0x8] sm:$0xff]
        %937 = vset.pattern.permute.xlu0 0
        %938 = vperm.xlu0 %937, %v934
        %v939 = vpop.permute.xlu0 %938
        %942 = vset.pattern.permute.xlu0 0
        %943 = vperm.xlu0 %942, %v935
        %v944 = vpop.permute.xlu0 %943
        %vm946 = vcmask 261120
        %v948 = vsel %vm946, %v932, 0
        %v951 = vsel %vm946, %v933, 0
        %953 = vmatprep.subr.mxu0 0.0
        %954 = vmatpush1.msra.mxu0 0.0
        %955 = vmatprep.subr.mxu0 0.0
        %956 = vmatpush1.msra.mxu0 0.0
        %957 = vmatprep.subr.mxu0 0.0
        %958 = vmatpush1.msra.mxu0 0.0
        %959 = vmatprep.subr.mxu0 0.0
        %960 = vmatpush1.msra.mxu0 0.0
        %961 = vmatprep.subr.mxu0 0.0
        %962 = vmatpush1.msra.mxu0 0.0
        %963 = vmatprep.subr.mxu0 0.0
        %964 = vmatpush1.msra.mxu0 0.0
        %965 = vmatprep.subr.mxu0 0.0
        %966 = vmatpush1.msra.mxu0 0.0
        %967 = vmatprep.subr.mxu0 0.0
        %968 = vmatpush1.msra.mxu0 0.0
        %969 = vmatprep.subr.mxu0 0.0
        %970 = vmatpush1.msra.mxu0 0.0
        %971 = vmatprep.subr.mxu0 0.0
        %972 = vmatpush1.msra.mxu0 0.0
        %973 = vmatprep.subr.mxu0 0.0
        %974 = vmatpush1.msra.mxu0 0.0
        %975 = vmatprep.subr.mxu0 0.0
        %976 = vmatpush1.msra.mxu0 0.0
        %977 = vmatprep.subr.mxu0 0.0
        %978 = vmatpush1.msra.mxu0 %v931
        %979 = vmatprep.subr.mxu0 0.0
        %980 = vmatpush1.msra.mxu0 %v930
        %981 = vmatprep.subr.mxu0 0.0
        %982 = vmatpush1.msra.mxu0 %v929
        %983 = vmatprep.subr.mxu0 0.0
        %984 = vmatpush1.msra.mxu0 %v928
        %985 = vmatprep.subr.mxu0 0.0
        %986 = vmatpush2.msra.mxu0 0.0
        %987 = vmatprep.subr.mxu0 0.0
        %988 = vmatpush2.msra.mxu0 0.0
        %989 = vmatprep.subr.mxu0 0.0
        %990 = vmatpush2.msra.mxu0 0.0
        %991 = vmatprep.subr.mxu0 0.0
        %992 = vmatpush2.msra.mxu0 0.0
        %993 = vmatprep.subr.mxu0 0.0
        %994 = vmatpush2.msra.mxu0 0.0
        %995 = vmatprep.subr.mxu0 0.0
        %996 = vmatpush2.msra.mxu0 0.0
        %997 = vmatprep.subr.mxu0 0.0
        %998 = vmatpush2.msra.mxu0 0.0
        %999 = vmatprep.subr.mxu0 0.0
        %1000 = vmatpush2.msra.mxu0 0.0
        %1001 = vmatprep.subr.mxu0 0.0
        %1002 = vmatpush2.msra.mxu0 0.0
        %1003 = vmatprep.subr.mxu0 0.0
        %1004 = vmatpush2.msra.mxu0 0.0
        %1005 = vmatprep.subr.mxu0 0.0
        %1006 = vmatpush2.msra.mxu0 0.0
        %1007 = vmatprep.subr.mxu0 0.0
        %1008 = vmatpush2.msra.mxu0 0.0
        %1009 = vmatprep.subr.mxu0 0.0
        %1010 = vmatpush2.msra.mxu0 0.0
        %1011 = vmatprep.subr.mxu0 0.0
        %1012 = vmatpush2.msra.mxu0 0.0
        %1013 = vmatprep.subr.mxu0 0.0
        %1014 = vmatpush2.msra.mxu0 0.0
        %1015 = vmatprep.subr.mxu0 0.0
        %1016 = vmatpush2.msra.mxu0 0.0
        %1017 = vmatprep.mubr.f32.mxu0 0.0
        %1018 = vmatmul.mubr.f32.gmra.mxu0 %v948
        %v1019 = vpop.f32.mrf.mxu0
        %v1020 = vadd.f32 %v939, %v1019
        %v1021 = vpop.f32.mrf.mxu0
        %1022 = vmatprep.mubr.f32.mxu0 0.0
        %1023 = vmatmul.mubr.f32.gmra.mxu0 %v951
        %v1024 = vpop.f32.mrf.mxu0
        %v1025 = vadd.f32 %v944, %v1024
        %v1026 = vpop.f32.mrf.mxu0
        %1027 = vdwg.mxu0
        %v1028 = vmax.f32 %v1020, 0.0
        %v1029 = vmax.f32 %v1025, 0.0
        %1030 = vst [vmem:[%s434] sm:$0xff] %v1028
        %1031 = vst [vmem:[%s434 + $0x8] sm:$0xff] %v1029
        %s1032 = sand.u32 %s285, 1
        %s1033 = scalar_lea.sflag [#allocation3], %s1032
        %s1034 = sand.u32 %s285, 1
        %s1035 = smul.addr %s1034, 16
        %s1036 = scalar_lea.vmem [#allocation2], %s1035
        // Predicated region
        $region61: #{tpu_custom_call.1} parent=59 // pred_check
          %p1037 = pneg %p295
        $region62: #{tpu_custom_call.1} parent=59 // pred_check_branch
          %1039 = sbr.rel (%p1037) target = $region64
        $region63: #{tpu_custom_call.1} parent=59 // pred_region
          %s1041 = ssub.s32 256, 256
          %1042 = vsyncadd %s1033, %s1041
          %s1043 = smul.addr %s28, 2
          %s1044 = sadd.s32 %s29, %s1043
          %s1045 = smul.addr %s1044, 128
          %s1046 = scalar_lea.hbm %s10, %s1045
          %s1047 = sshll.u32 %s1036, 4
          %s1048 = int_to_ptr.vmem [resolvable:$true] %s1047
          %1053 = dma.vmem_to_hbm [thread:$0]  %s1048, 256, %s1046, %s1033, 128, 128, 8
        $region64: #{tpu_custom_call.1} parent=59 // pred_fallthru
          _
      $region60: #{tpu_custom_call.1} parent=5 // pred_fallthru
        _
      %p1054 = scmp.le.s32.totalorder 2, %s19
      // Predicated region
      $region65: #{tpu_custom_call.1} parent=5 // pred_check
        %p1055 = pneg %p1054
      $region66: #{tpu_custom_call.1} parent=5 // pred_check_branch
        %1057 = sbr.rel (%p1055) target = $region68
      $region67: #{tpu_custom_call.1} parent=5 // pred_region
        %s1058 = ssub.s32 %s19, 2
        // Predicated region
        $region69: #{tpu_custom_call.1} parent=67 // pred_check
          %p1059 = pneg %p301
        $region70: #{tpu_custom_call.1} parent=67 // pred_check_branch
          %1061 = sbr.rel (%p1059) target = $region72
        $region71: #{tpu_custom_call.1} parent=67 // pred_region
          %s1062 = sand.u32 %s286, 1
          %s1063 = scalar_lea.sflag [#allocation3], %s1062
          %s1064 = sand.u32 %s286, 1
          %s1065 = smul.addr %s1064, 16
          %s1066 = scalar_lea.vmem [#allocation2], %s1065
          %1067 = dma.done %s1063, 256
        $region72: #{tpu_custom_call.1} parent=67 // pred_fallthru
          _
      $region68: #{tpu_custom_call.1} parent=5 // pred_fallthru
        _
    $region6: #{tpu_custom_call.1} parent=1 // loop_footer
      %s23 = sadd.s32 1, %s19
    $region7: #{tpu_custom_call.1} parent=1 // loop_footer_branch
      %18 = sbr.rel target = $region3
    $region8: #{tpu_custom_call.1} parent=1 // loop_exit
      _
    %1068 = vsyncpa [#allocation3], 1
    %s1069 = scalar_lea.sflag [#allocation3], 1
    %1070 = vsyncpa %s1069, 1

</llo_original>
